<compile_context>
chip_gen: v7x
topology: tpu7x:2x2x1
jax: 0.10.0
libtpu: 0.0.40
codegen_flags: <defaults>
</compile_context>

<pallas_src>
import jax
import jax.numpy as jnp
from jax import lax
from jax.experimental import pallas as pl
from jax.experimental.pallas import tpu as pltpu

BN_EPS = 1e-5

_VMEM = pl.BlockSpec(memory_space=pltpu.MemorySpace.VMEM)
_SMEM = pl.BlockSpec(memory_space=pltpu.MemorySpace.SMEM)


# ---------------------------------------------------------------------------
# Padding helpers
# ---------------------------------------------------------------------------

def _round_up(x, m):
    return (x + m - 1) // m * m


def _pad2(a, rows, cols):
    """Zero-pad a 2-D array to (rows, cols) in float32."""
    out = jnp.zeros((rows, cols), jnp.float32)
    return out.at[: a.shape[0], : a.shape[1]].set(a.astype(jnp.float32))


# ---------------------------------------------------------------------------
# Fused kernel (single grid point, everything VMEM-resident)
# ---------------------------------------------------------------------------

def _make_fused_kernel(num_layers: int, n_real: int):
    """num_layers / n_real are static Python ints closed over by the kernel."""

    def _masked_bn(h, row_mask, gamma, beta):
        # One-pass biased batch statistics over the n_real valid rows only.
        hm = h * row_mask
        mean = jnp.sum(hm, axis=0, keepdims=True) * (1.0 / n_real)
        mean_sq = jnp.sum(hm * hm, axis=0, keepdims=True) * (1.0 / n_real)
        var = jnp.maximum(mean_sq - mean * mean, 0.0)
        return (h - mean) * lax.rsqrt(var + BN_EPS) * gamma + beta

    def kernel(a_ref, x_ref, w1_ref, b1_ref, w2_ref, b2_ref,
               bn_g_ref, bn_b_ref, pw_ref, pb_ref, pg_ref, pbb_ref,
               enc_alpha_ref, proj_alpha_ref,
               z_ref, g_ref):
        a = a_ref[...]                       # [Np, Np]  (A + I), resident for all layers
        h = x_ref[...]                       # [Np, P]
        alpha = enc_alpha_ref[0]             # shared encoder PReLU parameter

        # ---- GIN layers (unrolled; weights stacked [L, P, P] / [L, 1, P]) ----
        for li in range(num_layers):
            agg = jnp.dot(a, h, preferred_element_type=jnp.float32)          # (1+eps)x + A@x
            h1 = jnp.dot(agg, w1_ref[li], preferred_element_type=jnp.float32) + b1_ref[li]
            h1 = jnp.maximum(h1, 0.0)                                         # ReLU
            h2 = jnp.dot(h1, w2_ref[li], preferred_element_type=jnp.float32) + b2_ref[li]
            h = jnp.where(h2 >= 0.0, h2, alpha * h2)                          # shared PReLU
            # TODO(synk): F.dropout(p=0.2, training=True) -> identity.

        # ---- encoder BatchNorm1d (batch statistics over the N real rows) ----
        np_rows = a.shape[0]
        row_mask = (lax.broadcasted_iota(jnp.int32, (np_rows, 1), 0) < n_real
                    ).astype(jnp.float32)
        z = _masked_bn(h, row_mask, bn_g_ref[...], bn_b_ref[...])
        z_ref[...] = z

        # ---- projection head: Linear -> BatchNorm1d -> PReLU (-> Dropout id) ----
        p = jnp.dot(z, pw_ref[...], preferred_element_type=jnp.float32) + pb_ref[...]
        p = _masked_bn(p, row_mask, pg_ref[...], pbb_ref[...])
        pa = proj_alpha_ref[0]
        g_ref[...] = jnp.where(p >= 0.0, p, pa * p)
        # TODO(synk): torch.nn.Dropout(0.2) in the projection head -> identity.

    return kernel


# ---------------------------------------------------------------------------
# Parameter construction (deterministic, synthetic init; logical shapes)
# ---------------------------------------------------------------------------

def init_params(key, input_dim, hidden_dim, num_layers):
    params = {"layers": []}
    dims = [input_dim] + [hidden_dim] * num_layers
    for li in range(num_layers):
        key, k1, k2, k3, k4 = jax.random.split(key, 5)
        din, dout = dims[li], dims[li + 1]
        s1 = 1.0 / jnp.sqrt(din)
        s2 = 1.0 / jnp.sqrt(dout)
        params["layers"].append({
            "w1": jax.random.uniform(k1, (din, dout), jnp.float32, -s1, s1),
            "b1": jax.random.uniform(k2, (1, dout), jnp.float32, -s1, s1),
            "w2": jax.random.uniform(k3, (dout, dout), jnp.float32, -s2, s2),
            "b2": jax.random.uniform(k4, (1, dout), jnp.float32, -s2, s2),
        })
    params["prelu_alpha"] = jnp.array([0.25], jnp.float32)          # shared encoder PReLU
    params["bn_gamma"] = jnp.ones((1, hidden_dim), jnp.float32)
    params["bn_beta"] = jnp.zeros((1, hidden_dim), jnp.float32)
    key, k5, k6 = jax.random.split(key, 3)
    sp = 1.0 / jnp.sqrt(hidden_dim)
    params["proj_w"] = jax.random.uniform(k5, (hidden_dim, hidden_dim), jnp.float32, -sp, sp)
    params["proj_b"] = jax.random.uniform(k6, (1, hidden_dim), jnp.float32, -sp, sp)
    params["proj_gamma"] = jnp.ones((1, hidden_dim), jnp.float32)
    params["proj_beta"] = jnp.zeros((1, hidden_dim), jnp.float32)
    params["proj_alpha"] = jnp.array([0.25], jnp.float32)
    return params


# ---------------------------------------------------------------------------
# Forward: build padded operands + dense A_hat in JAX, run the fused kernel
# ---------------------------------------------------------------------------

def gconv_forward(params, x, edge_index, edge_weight=None):
    x = x.astype(jnp.float32)
    N, input_dim = x.shape
    num_layers = len(params["layers"])
    hidden_dim = params["layers"][-1]["w2"].shape[1]

    P = _round_up(max(input_dim, hidden_dim), 128)   # lane-dense feature width
    Np = _round_up(N, 128)                           # padded node count

    # ---- pack / zero-pad parameters (zero padding keeps the math exact) ----
    w1 = jnp.stack([_pad2(l["w1"], P, P) for l in params["layers"]])   # [L, P, P]
    b1 = jnp.stack([_pad2(l["b1"], 1, P) for l in params["layers"]])   # [L, 1, P]
    w2 = jnp.stack([_pad2(l["w2"], P, P) for l in params["layers"]])   # [L, P, P]
    b2 = jnp.stack([_pad2(l["b2"], 1, P) for l in params["layers"]])   # [L, 1, P]
    bn_g = _pad2(params["bn_gamma"], 1, P)
    bn_b = _pad2(params["bn_beta"], 1, P)
    pw = _pad2(params["proj_w"], P, P)
    pb = _pad2(params["proj_b"], 1, P)
    pg = _pad2(params["proj_gamma"], 1, P)
    pbb = _pad2(params["proj_beta"], 1, P)
    enc_alpha = params["prelu_alpha"]
    proj_alpha = params["proj_alpha"]

    xp = _pad2(x, Np, P)

    # ---- dense adjacency with self loops: A_hat = A + (1+eps)*I, eps = 0 ----
    # TODO(synk): standard PyG GINConv ignores edge_weight; kept folded into A here to
    #             match the previous accepted behaviour of this translation.
    src = edge_index[0]
    dst = edge_index[1]
    if edge_weight is None:
        edge_weight = jnp.ones(src.shape, jnp.float32)
    a_hat = (jnp.zeros((Np, Np), jnp.float32)
             .at[dst, src].add(edge_weight.astype(jnp.float32))
             + jnp.eye(Np, dtype=jnp.float32))

    kernel = _make_fused_kernel(num_layers, N)

    operands = (a_hat, xp, w1, b1, w2, b2, bn_g, bn_b, pw, pb, pg, pbb)
    flops = num_layers * 2 * Np * P * (Np + 2 * P) + 2 * Np * P * P
    bytes_in = sum(int(o.size) * o.dtype.itemsize for o in operands) + 2 * 4
    bytes_out = 2 * Np * P * 4
    cost = pl.CostEstimate(flops=flops, transcendentals=2 * P,
                           bytes_accessed=bytes_in + bytes_out)

    z_full, g_full = pl.pallas_call(
        kernel,
        out_shape=(jax.ShapeDtypeStruct((Np, P), jnp.float32),
                   jax.ShapeDtypeStruct((Np, P), jnp.float32)),
        in_specs=[_VMEM] * len(operands) + [_SMEM, _SMEM],
        out_specs=(_VMEM, _VMEM),
        compiler_params=pltpu.CompilerParams(vmem_limit_bytes=32 * 1024 * 1024),
        cost_estimate=cost,
    )(*operands, enc_alpha, proj_alpha)

    # strip padding back to logical shapes
    return z_full[:N, :hidden_dim], g_full[:N, :hidden_dim]


if __name__ == "__main__":
    N, INPUT_DIM, HIDDEN_DIM, NUM_LAYERS, E = 32, 8, 32, 2, 64

    key = jax.random.PRNGKey(0)
    key, kx, ke, kw, kp = jax.random.split(key, 5)

    x = jax.random.normal(kx, (N, INPUT_DIM), jnp.float32)
    edge_index = jax.random.randint(ke, (2, E), 0, N, dtype=jnp.int32)
    edge_weight = jax.random.uniform(kw, (E,), jnp.float32)

    params = init_params(kp, INPUT_DIM, HIDDEN_DIM, NUM_LAYERS)

    z, g = gconv_forward(params, x, edge_index, edge_weight)
    jax.block_until_ready((z, g))

    assert z.shape == (N, HIDDEN_DIM) and g.shape == (N, HIDDEN_DIM)
    assert jnp.all(jnp.isfinite(z)) and jnp.all(jnp.isfinite(g))
    print("KERNEL_OK")
</pallas_src>

<mosaic_0001>
module attributes {stable_mosaic.version = 11 : i64} {
  func.func @kernel(%arg0: memref<128x128xf32, #tpu.memory_space<vmem>>, %arg1: memref<128x128xf32, #tpu.memory_space<vmem>>, %arg2: memref<2x128x128xf32, #tpu.memory_space<vmem>>, %arg3: memref<2x1x128xf32, #tpu.memory_space<vmem>>, %arg4: memref<2x128x128xf32, #tpu.memory_space<vmem>>, %arg5: memref<2x1x128xf32, #tpu.memory_space<vmem>>, %arg6: memref<1x128xf32, #tpu.memory_space<vmem>>, %arg7: memref<1x128xf32, #tpu.memory_space<vmem>>, %arg8: memref<128x128xf32, #tpu.memory_space<vmem>>, %arg9: memref<1x128xf32, #tpu.memory_space<vmem>>, %arg10: memref<1x128xf32, #tpu.memory_space<vmem>>, %arg11: memref<1x128xf32, #tpu.memory_space<vmem>>, %arg12: memref<1xf32, #tpu.memory_space<smem>>, %arg13: memref<1xf32, #tpu.memory_space<smem>>, %arg14: memref<128x128xf32, #tpu.memory_space<vmem>>, %arg15: memref<128x128xf32, #tpu.memory_space<vmem>>) attributes {dimension_semantics = [], scalar_prefetch = 0 : i64, scratch_operands = 0 : i64, tpu.core_type = #tpu.core_type<tc>} {
    %c0 = arith.constant 0 : index
    %c0_0 = arith.constant 0 : index
    %0 = vector.load %arg0[%c0, %c0_0] : memref<128x128xf32, #tpu.memory_space<vmem>>, vector<128x128xf32>
    %c0_1 = arith.constant 0 : index
    %c0_2 = arith.constant 0 : index
    %1 = vector.load %arg1[%c0_1, %c0_2] : memref<128x128xf32, #tpu.memory_space<vmem>>, vector<128x128xf32>
    %c0_3 = arith.constant 0 : index
    %2 = memref.load %arg12[%c0_3] : memref<1xf32, #tpu.memory_space<smem>>
    %cst = arith.constant dense<0.000000e+00> : vector<128x128xf32>
    %3 = tpu.matmul %0, %1, %cst {dimension_numbers = #tpu.dot_dimension_numbers<[1], [0], [0], [1], [0, 0, 1, 1], [], []>} : vector<128x128xf32>, vector<128x128xf32>, vector<128x128xf32> -> vector<128x128xf32>
    %c0_4 = arith.constant 0 : index
    %c0_5 = arith.constant 0 : index
    %c0_6 = arith.constant 0 : index
    %4 = vector.load %arg2[%c0_4, %c0_5, %c0_6] : memref<2x128x128xf32, #tpu.memory_space<vmem>>, vector<1x128x128xf32>
    %5 = vector.shape_cast %4 : vector<1x128x128xf32> to vector<128x128xf32>
    %cst_7 = arith.constant dense<0.000000e+00> : vector<128x128xf32>
    %6 = tpu.matmul %3, %5, %cst_7 {dimension_numbers = #tpu.dot_dimension_numbers<[1], [0], [0], [1], [0, 0, 1, 1], [], []>} : vector<128x128xf32>, vector<128x128xf32>, vector<128x128xf32> -> vector<128x128xf32>
    %c0_8 = arith.constant 0 : index
    %c0_9 = arith.constant 0 : index
    %c0_10 = arith.constant 0 : index
    %7 = vector.load %arg3[%c0_8, %c0_9, %c0_10] : memref<2x1x128xf32, #tpu.memory_space<vmem>>, vector<1x1x128xf32>
    %8 = vector.shape_cast %7 : vector<1x1x128xf32> to vector<1x128xf32>
    %9 = vector.broadcast %8 : vector<1x128xf32> to vector<128x128xf32>
    %10 = arith.addf %6, %9 : vector<128x128xf32>
    %cst_11 = arith.constant 0.000000e+00 : f32
    %11 = vector.broadcast %cst_11 : f32 to vector<128x128xf32>
    %12 = arith.maximumf %10, %11 : vector<128x128xf32>
    %c0_12 = arith.constant 0 : index
    %c0_13 = arith.constant 0 : index
    %c0_14 = arith.constant 0 : index
    %13 = vector.load %arg4[%c0_12, %c0_13, %c0_14] : memref<2x128x128xf32, #tpu.memory_space<vmem>>, vector<1x128x128xf32>
    %14 = vector.shape_cast %13 : vector<1x128x128xf32> to vector<128x128xf32>
    %cst_15 = arith.constant dense<0.000000e+00> : vector<128x128xf32>
    %15 = tpu.matmul %12, %14, %cst_15 {dimension_numbers = #tpu.dot_dimension_numbers<[1], [0], [0], [1], [0, 0, 1, 1], [], []>} : vector<128x128xf32>, vector<128x128xf32>, vector<128x128xf32> -> vector<128x128xf32>
    %c0_16 = arith.constant 0 : index
    %c0_17 = arith.constant 0 : index
    %c0_18 = arith.constant 0 : index
    %16 = vector.load %arg5[%c0_16, %c0_17, %c0_18] : memref<2x1x128xf32, #tpu.memory_space<vmem>>, vector<1x1x128xf32>
    %17 = vector.shape_cast %16 : vector<1x1x128xf32> to vector<1x128xf32>
    %18 = vector.broadcast %17 : vector<1x128xf32> to vector<128x128xf32>
    %19 = arith.addf %15, %18 : vector<128x128xf32>
    %cst_19 = arith.constant 0.000000e+00 : f32
    %20 = vector.broadcast %cst_19 : f32 to vector<128x128xf32>
    %21 = arith.cmpf oge, %19, %20 : vector<128x128xf32>
    %22 = vector.broadcast %2 : f32 to vector<128x128xf32>
    %23 = arith.mulf %22, %19 : vector<128x128xf32>
    %24 = arith.select %21, %19, %23 : vector<128x128xi1>, vector<128x128xf32>
    %cst_20 = arith.constant dense<0.000000e+00> : vector<128x128xf32>
    %25 = tpu.matmul %0, %24, %cst_20 {dimension_numbers = #tpu.dot_dimension_numbers<[1], [0], [0], [1], [0, 0, 1, 1], [], []>} : vector<128x128xf32>, vector<128x128xf32>, vector<128x128xf32> -> vector<128x128xf32>
    %c1 = arith.constant 1 : index
    %c0_21 = arith.constant 0 : index
    %c0_22 = arith.constant 0 : index
    %26 = vector.load %arg2[%c1, %c0_21, %c0_22] : memref<2x128x128xf32, #tpu.memory_space<vmem>>, vector<1x128x128xf32>
    %27 = vector.shape_cast %26 : vector<1x128x128xf32> to vector<128x128xf32>
    %cst_23 = arith.constant dense<0.000000e+00> : vector<128x128xf32>
    %28 = tpu.matmul %25, %27, %cst_23 {dimension_numbers = #tpu.dot_dimension_numbers<[1], [0], [0], [1], [0, 0, 1, 1], [], []>} : vector<128x128xf32>, vector<128x128xf32>, vector<128x128xf32> -> vector<128x128xf32>
    %c1_24 = arith.constant 1 : index
    %c0_25 = arith.constant 0 : index
    %c0_26 = arith.constant 0 : index
    %29 = vector.load %arg3[%c1_24, %c0_25, %c0_26] : memref<2x1x128xf32, #tpu.memory_space<vmem>>, vector<1x1x128xf32>
    %30 = vector.shape_cast %29 : vector<1x1x128xf32> to vector<1x128xf32>
    %31 = vector.broadcast %30 : vector<1x128xf32> to vector<128x128xf32>
    %32 = arith.addf %28, %31 : vector<128x128xf32>
    %cst_27 = arith.constant 0.000000e+00 : f32
    %33 = vector.broadcast %cst_27 : f32 to vector<128x128xf32>
    %34 = arith.maximumf %32, %33 : vector<128x128xf32>
    %c1_28 = arith.constant 1 : index
    %c0_29 = arith.constant 0 : index
    %c0_30 = arith.constant 0 : index
    %35 = vector.load %arg4[%c1_28, %c0_29, %c0_30] : memref<2x128x128xf32, #tpu.memory_space<vmem>>, vector<1x128x128xf32>
    %36 = vector.shape_cast %35 : vector<1x128x128xf32> to vector<128x128xf32>
    %cst_31 = arith.constant dense<0.000000e+00> : vector<128x128xf32>
    %37 = tpu.matmul %34, %36, %cst_31 {dimension_numbers = #tpu.dot_dimension_numbers<[1], [0], [0], [1], [0, 0, 1, 1], [], []>} : vector<128x128xf32>, vector<128x128xf32>, vector<128x128xf32> -> vector<128x128xf32>
    %c1_32 = arith.constant 1 : index
    %c0_33 = arith.constant 0 : index
    %c0_34 = arith.constant 0 : index
    %38 = vector.load %arg5[%c1_32, %c0_33, %c0_34] : memref<2x1x128xf32, #tpu.memory_space<vmem>>, vector<1x1x128xf32>
    %39 = vector.shape_cast %38 : vector<1x1x128xf32> to vector<1x128xf32>
    %40 = vector.broadcast %39 : vector<1x128xf32> to vector<128x128xf32>
    %41 = arith.addf %37, %40 : vector<128x128xf32>
    %cst_35 = arith.constant 0.000000e+00 : f32
    %42 = vector.broadcast %cst_35 : f32 to vector<128x128xf32>
    %43 = arith.cmpf oge, %41, %42 : vector<128x128xf32>
    %44 = vector.broadcast %2 : f32 to vector<128x128xf32>
    %45 = arith.mulf %44, %41 : vector<128x128xf32>
    %46 = arith.select %43, %41, %45 : vector<128x128xi1>, vector<128x128xf32>
    %47 = tpu.iota {dimensions = array<i32: 0>} : vector<128x1xi32>
    %c32_i32 = arith.constant 32 : i32
    %48 = vector.broadcast %c32_i32 : i32 to vector<128x1xi32>
    %49 = arith.cmpi slt, %47, %48 : vector<128x1xi32>
    %50 = arith.extui %49 : vector<128x1xi1> to vector<128x1xi32>
    %51 = arith.sitofp %50 : vector<128x1xi32> to vector<128x1xf32>
    %c0_36 = arith.constant 0 : index
    %c0_37 = arith.constant 0 : index
    %52 = vector.load %arg6[%c0_36, %c0_37] : memref<1x128xf32, #tpu.memory_space<vmem>>, vector<1x128xf32>
    %c0_38 = arith.constant 0 : index
    %c0_39 = arith.constant 0 : index
    %53 = vector.load %arg7[%c0_38, %c0_39] : memref<1x128xf32, #tpu.memory_space<vmem>>, vector<1x128xf32>
    %54 = vector.broadcast %51 : vector<128x1xf32> to vector<128x128xf32>
    %55 = arith.mulf %46, %54 : vector<128x128xf32>
    %cst_40 = arith.constant dense<0.000000e+00> : vector<128xf32>
    %56 = vector.multi_reduction <add>, %55, %cst_40 [0] : vector<128x128xf32> to vector<128xf32>
    %57 = vector.shape_cast %56 : vector<128xf32> to vector<1x128xf32>
    %cst_41 = arith.constant 3.125000e-02 : f32
    %58 = vector.broadcast %cst_41 : f32 to vector<1x128xf32>
    %59 = arith.mulf %57, %58 : vector<1x128xf32>
    %60 = arith.mulf %55, %55 : vector<128x128xf32>
    %cst_42 = arith.constant dense<0.000000e+00> : vector<128xf32>
    %61 = vector.multi_reduction <add>, %60, %cst_42 [0] : vector<128x128xf32> to vector<128xf32>
    %62 = vector.shape_cast %61 : vector<128xf32> to vector<1x128xf32>
    %cst_43 = arith.constant 3.125000e-02 : f32
    %63 = vector.broadcast %cst_43 : f32 to vector<1x128xf32>
    %64 = arith.mulf %62, %63 : vector<1x128xf32>
    %65 = arith.mulf %59, %59 : vector<1x128xf32>
    %66 = arith.subf %64, %65 : vector<1x128xf32>
    %cst_44 = arith.constant 0.000000e+00 : f32
    %67 = vector.broadcast %cst_44 : f32 to vector<1x128xf32>
    %68 = arith.maximumf %66, %67 : vector<1x128xf32>
    %69 = vector.broadcast %59 : vector<1x128xf32> to vector<128x128xf32>
    %70 = arith.subf %46, %69 : vector<128x128xf32>
    %cst_45 = arith.constant 9.99999974E-6 : f32
    %71 = vector.broadcast %cst_45 : f32 to vector<1x128xf32>
    %72 = arith.addf %68, %71 : vector<1x128xf32>
    %73 = math.rsqrt %72 : vector<1x128xf32>
    %74 = vector.broadcast %73 : vector<1x128xf32> to vector<128x128xf32>
    %75 = arith.mulf %70, %74 : vector<128x128xf32>
    %76 = vector.broadcast %52 : vector<1x128xf32> to vector<128x128xf32>
    %77 = arith.mulf %75, %76 : vector<128x128xf32>
    %78 = vector.broadcast %53 : vector<1x128xf32> to vector<128x128xf32>
    %79 = arith.addf %77, %78 : vector<128x128xf32>
    %c0_46 = arith.constant 0 : index
    %c0_47 = arith.constant 0 : index
    %80 = vector.load %arg14[%c0_46, %c0_47] : memref<128x128xf32, #tpu.memory_space<vmem>>, vector<128x128xf32>
    tpu.vector_store %arg14[%c0_46, %c0_47], %79 {strides = array<i32>} : memref<128x128xf32, #tpu.memory_space<vmem>>, vector<128x128xf32>,
    %c0_48 = arith.constant 0 : index
    %c0_49 = arith.constant 0 : index
    %81 = vector.load %arg8[%c0_48, %c0_49] : memref<128x128xf32, #tpu.memory_space<vmem>>, vector<128x128xf32>
    %cst_50 = arith.constant dense<0.000000e+00> : vector<128x128xf32>
    %82 = tpu.matmul %79, %81, %cst_50 {dimension_numbers = #tpu.dot_dimension_numbers<[1], [0], [0], [1], [0, 0, 1, 1], [], []>} : vector<128x128xf32>, vector<128x128xf32>, vector<128x128xf32> -> vector<128x128xf32>
    %c0_51 = arith.constant 0 : index
    %c0_52 = arith.constant 0 : index
    %83 = vector.load %arg9[%c0_51, %c0_52] : memref<1x128xf32, #tpu.memory_space<vmem>>, vector<1x128xf32>
    %84 = vector.broadcast %83 : vector<1x128xf32> to vector<128x128xf32>
    %85 = arith.addf %82, %84 : vector<128x128xf32>
    %c0_53 = arith.constant 0 : index
    %c0_54 = arith.constant 0 : index
    %86 = vector.load %arg10[%c0_53, %c0_54] : memref<1x128xf32, #tpu.memory_space<vmem>>, vector<1x128xf32>
    %c0_55 = arith.constant 0 : index
    %c0_56 = arith.constant 0 : index
    %87 = vector.load %arg11[%c0_55, %c0_56] : memref<1x128xf32, #tpu.memory_space<vmem>>, vector<1x128xf32>
    %88 = vector.broadcast %51 : vector<128x1xf32> to vector<128x128xf32>
    %89 = arith.mulf %85, %88 : vector<128x128xf32>
    %cst_57 = arith.constant dense<0.000000e+00> : vector<128xf32>
    %90 = vector.multi_reduction <add>, %89, %cst_57 [0] : vector<128x128xf32> to vector<128xf32>
    %91 = vector.shape_cast %90 : vector<128xf32> to vector<1x128xf32>
    %cst_58 = arith.constant 3.125000e-02 : f32
    %92 = vector.broadcast %cst_58 : f32 to vector<1x128xf32>
    %93 = arith.mulf %91, %92 : vector<1x128xf32>
    %94 = arith.mulf %89, %89 : vector<128x128xf32>
    %cst_59 = arith.constant dense<0.000000e+00> : vector<128xf32>
    %95 = vector.multi_reduction <add>, %94, %cst_59 [0] : vector<128x128xf32> to vector<128xf32>
    %96 = vector.shape_cast %95 : vector<128xf32> to vector<1x128xf32>
    %cst_60 = arith.constant 3.125000e-02 : f32
    %97 = vector.broadcast %cst_60 : f32 to vector<1x128xf32>
    %98 = arith.mulf %96, %97 : vector<1x128xf32>
    %99 = arith.mulf %93, %93 : vector<1x128xf32>
    %100 = arith.subf %98, %99 : vector<1x128xf32>
    %cst_61 = arith.constant 0.000000e+00 : f32
    %101 = vector.broadcast %cst_61 : f32 to vector<1x128xf32>
    %102 = arith.maximumf %100, %101 : vector<1x128xf32>
    %103 = vector.broadcast %93 : vector<1x128xf32> to vector<128x128xf32>
    %104 = arith.subf %85, %103 : vector<128x128xf32>
    %cst_62 = arith.constant 9.99999974E-6 : f32
    %105 = vector.broadcast %cst_62 : f32 to vector<1x128xf32>
    %106 = arith.addf %102, %105 : vector<1x128xf32>
    %107 = math.rsqrt %106 : vector<1x128xf32>
    %108 = vector.broadcast %107 : vector<1x128xf32> to vector<128x128xf32>
    %109 = arith.mulf %104, %108 : vector<128x128xf32>
    %110 = vector.broadcast %86 : vector<1x128xf32> to vector<128x128xf32>
    %111 = arith.mulf %109, %110 : vector<128x128xf32>
    %112 = vector.broadcast %87 : vector<1x128xf32> to vector<128x128xf32>
    %113 = arith.addf %111, %112 : vector<128x128xf32>
    %c0_63 = arith.constant 0 : index
    %114 = memref.load %arg13[%c0_63] : memref<1xf32, #tpu.memory_space<smem>>
    %cst_64 = arith.constant 0.000000e+00 : f32
    %115 = vector.broadcast %cst_64 : f32 to vector<128x128xf32>
    %116 = arith.cmpf oge, %113, %115 : vector<128x128xf32>
    %117 = vector.broadcast %114 : f32 to vector<128x128xf32>
    %118 = arith.mulf %117, %113 : vector<128x128xf32>
    %119 = arith.select %116, %113, %118 : vector<128x128xi1>, vector<128x128xf32>
    %c0_65 = arith.constant 0 : index
    %c0_66 = arith.constant 0 : index
    %120 = vector.load %arg15[%c0_65, %c0_66] : memref<128x128xf32, #tpu.memory_space<vmem>>, vector<128x128xf32>
    tpu.vector_store %arg15[%c0_65, %c0_66], %119 {strides = array<i32>} : memref<128x128xf32, #tpu.memory_space<vmem>>, vector<128x128xf32>,
    return
  }
}

</mosaic_0001>

<llo_original>
// kernel: tpu_custom_call.1
$region0: #{tpu_custom_call.1}
  #allocation0 [shape = 'u32[]', space=smem, size = 0x4, offset = 0x4, fixed_abs, tag = 'smem constant byte address 0x4 - core index']
  #allocation1 [shape = 'u32[144,128]{1,0:T(1,128)}', space=vmem, size = 0x12000, scoped, tag = 'internal scratch']
  #allocation2 [shape = 'f32[1]{0:T(128)S(6)}', space=smem, size = 0x200, scoped, tag = 'scoped memory for tpu_custom_call.1']
  #allocation3 [shape = 'f32[1]{0:T(128)S(6)}', space=smem, size = 0x200, scoped, tag = 'scoped memory for tpu_custom_call.1']
  %s0 = inlined_call_operand.hbm [shape: f32[128,128], index: 0, kind: input, shape index: {}]
  %s1 = inlined_call_operand.hbm [shape: f32[128,128], index: 1, kind: input, shape index: {}]
  %s2 = inlined_call_operand.hbm [shape: f32[2,128,128], index: 2, kind: input, shape index: {}]
  %s3 = inlined_call_operand.vmem [shape: f32[2,1,128], index: 3, kind: input, shape index: {}]
  %s4 = inlined_call_operand.hbm [shape: f32[2,128,128], index: 4, kind: input, shape index: {}]
  %s5 = inlined_call_operand.vmem [shape: f32[2,1,128], index: 5, kind: input, shape index: {}]
  %s6 = inlined_call_operand.vmem [shape: f32[1,128], index: 6, kind: input, shape index: {}]
  %s7 = inlined_call_operand.vmem [shape: f32[1,128], index: 7, kind: input, shape index: {}]
  %s8 = inlined_call_operand.hbm [shape: f32[128,128], index: 8, kind: input, shape index: {}]
  %s9 = inlined_call_operand.vmem [shape: f32[1,128], index: 9, kind: input, shape index: {}]
  %s10 = inlined_call_operand.vmem [shape: f32[1,128], index: 10, kind: input, shape index: {}]
  %s11 = inlined_call_operand.vmem [shape: f32[1,128], index: 11, kind: input, shape index: {}]
  %s12 = inlined_call_operand.<no memory space> [shape: f32[1], index: 12, kind: input, shape index: {}]
  %s13 = inlined_call_operand.<no memory space> [shape: f32[1], index: 13, kind: input, shape index: {}]
  %s14 = inlined_call_operand.hbm [shape: f32[128,128], index: 14, kind: output, shape index: {0}]
  %s15 = inlined_call_operand.hbm [shape: f32[128,128], index: 15, kind: output, shape index: {1}]
  %16 = xla_tuple %s14, %s15
  %s17 = sld [smem:[#allocation0]]
  $region94: #{tpu_custom_call.1} parent=0
    _
  %s19 = ssub.s32 1, %s17
  %s20 = scalar_select 0, %s19, %s17
  %21 = sst [smem:[#allocation2]] %s12
  %22 = sst [smem:[#allocation3]] %s13
  $region1: #{tpu_custom_call.1} parent=0
    #allocation4 [shape = 'u8[65536]{0}', space=vmem, size = 0x10000, scoped, tag = 'input window, operand 0, single buffered']
    #allocation5 [shape = 's32[1]{0}', space=sflag, size = 0x4, scoped, tag = 'scoped memory for tpu_custom_call.1']
    #allocation6 [shape = 's32[1]{0}', space=sflag, size = 0x4, scoped, tag = 'scoped memory for tpu_custom_call.1']
    #allocation7 [shape = 'u8[65536]{0}', space=vmem, size = 0x10000, scoped, tag = 'input window, operand 1, single buffered']
    #allocation8 [shape = 's32[1]{0}', space=sflag, size = 0x4, scoped, tag = 'scoped memory for tpu_custom_call.1']
    #allocation9 [shape = 'u8[131072]{0}', space=vmem, size = 0x20000, scoped, tag = 'input window, operand 2, single buffered']
    #allocation10 [shape = 'u8[131072]{0}', space=vmem, size = 0x20000, scoped, tag = 'input window, operand 4, single buffered']
    #allocation11 [shape = 's32[1]{0}', space=sflag, size = 0x4, scoped, tag = 'scoped memory for tpu_custom_call.1']
    #allocation12 [shape = 'u8[65536]{0}', space=vmem, size = 0x10000, scoped, tag = 'input window, operand 8, single buffered']
    #allocation13 [shape = 'u8[65536]{0}', space=vmem, size = 0x10000, scoped, tag = 'output window, operand 0, single buffered']
    #allocation14 [shape = 'u8[65536]{0}', space=vmem, size = 0x10000, scoped, tag = 'output window, operand 1, single buffered']
    #allocation15 [shape = 's32[1]{0}', space=sflag, size = 0x4, scoped, tag = 'scoped memory for tpu_custom_call.1']
    %23 = vsyncpa [#allocation5], 0
    %24 = vsyncpa [#allocation8], 0
    %25 = vsyncpa [#allocation11], 0
    %26 = vsyncpa [#allocation6], 0
    %27 = vsyncpa [#allocation15], 0
    // Predicated region
    $region2: #{tpu_custom_call.1} parent=1 // pred_check
      _
    $region3: #{tpu_custom_call.1} parent=1 // pred_check_branch
      %29 = sbr.rel (0) target = $region5
    $region4: #{tpu_custom_call.1} parent=1 // pred_region
      %s31 = ssub.s32 2048, 2048
      %32 = vsyncadd [#allocation5], %s31
      %s33 = sshll.u32 [#allocation4], 4
      %s34 = int_to_ptr.vmem [resolvable:$true] %s33
      %39 = dma.hbm_to_vmem [thread:$0]  %s0, 2048, %s34, [#allocation5], 128, 128, 8
    $region5: #{tpu_custom_call.1} parent=1 // pred_fallthru
      _
    // Predicated region
    $region6: #{tpu_custom_call.1} parent=1 // pred_check
      _
    $region7: #{tpu_custom_call.1} parent=1 // pred_check_branch
      %41 = sbr.rel (0) target = $region9
    $region8: #{tpu_custom_call.1} parent=1 // pred_region
      %s43 = ssub.s32 2048, 2048
      %44 = vsyncadd [#allocation8], %s43
      %s45 = sshll.u32 [#allocation7], 4
      %s46 = int_to_ptr.vmem [resolvable:$true] %s45
      %51 = dma.hbm_to_vmem [thread:$0]  %s1, 2048, %s46, [#allocation8], 128, 128, 8
    $region9: #{tpu_custom_call.1} parent=1 // pred_fallthru
      _
    // Predicated region
    $region10: #{tpu_custom_call.1} parent=1 // pred_check
      _
    $region11: #{tpu_custom_call.1} parent=1 // pred_check_branch
      %53 = sbr.rel (0) target = $region13
    $region12: #{tpu_custom_call.1} parent=1 // pred_region
      %s55 = ssub.s32 4096, 4096
      %56 = vsyncadd [#allocation8], %s55
      %s57 = sshll.u32 [#allocation9], 4
      %s58 = int_to_ptr.vmem [resolvable:$true] %s57
      %63 = dma.hbm_to_vmem [thread:$0]  %s2, 4096, %s58, [#allocation8], 128, 128, 8
    $region13: #{tpu_custom_call.1} parent=1 // pred_fallthru
      _
    // Predicated region
    $region14: #{tpu_custom_call.1} parent=1 // pred_check
      _
    $region15: #{tpu_custom_call.1} parent=1 // pred_check_branch
      %65 = sbr.rel (0) target = $region17
    $region16: #{tpu_custom_call.1} parent=1 // pred_region
      _
    $region17: #{tpu_custom_call.1} parent=1 // pred_fallthru
      _
    // Predicated region
    $region18: #{tpu_custom_call.1} parent=1 // pred_check
      _
    $region19: #{tpu_custom_call.1} parent=1 // pred_check_branch
      %67 = sbr.rel (0) target = $region21
    $region20: #{tpu_custom_call.1} parent=1 // pred_region
      %s69 = ssub.s32 4096, 4096
      %70 = vsyncadd [#allocation11], %s69
      %s71 = sshll.u32 [#allocation10], 4
      %s72 = int_to_ptr.vmem [resolvable:$true] %s71
      %77 = dma.hbm_to_vmem [thread:$0]  %s4, 4096, %s72, [#allocation11], 128, 128, 8
    $region21: #{tpu_custom_call.1} parent=1 // pred_fallthru
      _
    // Predicated region
    $region22: #{tpu_custom_call.1} parent=1 // pred_check
      _
    $region23: #{tpu_custom_call.1} parent=1 // pred_check_branch
      %79 = sbr.rel (0) target = $region25
    $region24: #{tpu_custom_call.1} parent=1 // pred_region
      _
    $region25: #{tpu_custom_call.1} parent=1 // pred_fallthru
      _
    // Predicated region
    $region26: #{tpu_custom_call.1} parent=1 // pred_check
      _
    $region27: #{tpu_custom_call.1} parent=1 // pred_check_branch
      %81 = sbr.rel (0) target = $region29
    $region28: #{tpu_custom_call.1} parent=1 // pred_region
      _
    $region29: #{tpu_custom_call.1} parent=1 // pred_fallthru
      _
    // Predicated region
    $region30: #{tpu_custom_call.1} parent=1 // pred_check
      _
    $region31: #{tpu_custom_call.1} parent=1 // pred_check_branch
      %83 = sbr.rel (0) target = $region33
    $region32: #{tpu_custom_call.1} parent=1 // pred_region
      _
    $region33: #{tpu_custom_call.1} parent=1 // pred_fallthru
      _
    // Predicated region
    $region34: #{tpu_custom_call.1} parent=1 // pred_check
      _
    $region35: #{tpu_custom_call.1} parent=1 // pred_check_branch
      %85 = sbr.rel (0) target = $region37
    $region36: #{tpu_custom_call.1} parent=1 // pred_region
      %s87 = ssub.s32 2048, 2048
      %88 = vsyncadd [#allocation11], %s87
      %s89 = sshll.u32 [#allocation12], 4
      %s90 = int_to_ptr.vmem [resolvable:$true] %s89
      %95 = dma.hbm_to_vmem [thread:$0]  %s8, 2048, %s90, [#allocation11], 128, 128, 8
    $region37: #{tpu_custom_call.1} parent=1 // pred_fallthru
      _
    // Predicated region
    $region38: #{tpu_custom_call.1} parent=1 // pred_check
      _
    $region39: #{tpu_custom_call.1} parent=1 // pred_check_branch
      %97 = sbr.rel (0) target = $region41
    $region40: #{tpu_custom_call.1} parent=1 // pred_region
      _
    $region41: #{tpu_custom_call.1} parent=1 // pred_fallthru
      _
    // Predicated region
    $region42: #{tpu_custom_call.1} parent=1 // pred_check
      _
    $region43: #{tpu_custom_call.1} parent=1 // pred_check_branch
      %99 = sbr.rel (0) target = $region45
    $region44: #{tpu_custom_call.1} parent=1 // pred_region
      _
    $region45: #{tpu_custom_call.1} parent=1 // pred_fallthru
      _
    // Predicated region
    $region46: #{tpu_custom_call.1} parent=1 // pred_check
      _
    $region47: #{tpu_custom_call.1} parent=1 // pred_check_branch
      %101 = sbr.rel (0) target = $region49
    $region48: #{tpu_custom_call.1} parent=1 // pred_region
      _
    $region49: #{tpu_custom_call.1} parent=1 // pred_fallthru
      _
    // Predicated region
    $region50: #{tpu_custom_call.1} parent=1 // pred_check
      _
    $region51: #{tpu_custom_call.1} parent=1 // pred_check_branch
      %103 = sbr.rel (0) target = $region53
    $region52: #{tpu_custom_call.1} parent=1 // pred_region
      _
    $region53: #{tpu_custom_call.1} parent=1 // pred_fallthru
      _
    // Predicated region
    $region54: #{tpu_custom_call.1} parent=1 // pred_check
      _
    $region55: #{tpu_custom_call.1} parent=1 // pred_check_branch
      %105 = sbr.rel (0) target = $region57
    $region56: #{tpu_custom_call.1} parent=1 // pred_region
      _
    $region57: #{tpu_custom_call.1} parent=1 // pred_fallthru
      _
    // Predicated region
    $region58: #{tpu_custom_call.1} parent=1 // pred_check
      _
    $region59: #{tpu_custom_call.1} parent=1 // pred_check_branch
      %107 = sbr.rel (0) target = $region61
    $region60: #{tpu_custom_call.1} parent=1 // pred_region
      %108 = dma.done [#allocation5], 2048
    $region61: #{tpu_custom_call.1} parent=1 // pred_fallthru
      _
    // Predicated region
    $region62: #{tpu_custom_call.1} parent=1 // pred_check
      _
    $region63: #{tpu_custom_call.1} parent=1 // pred_check_branch
      %110 = sbr.rel (0) target = $region65
    $region64: #{tpu_custom_call.1} parent=1 // pred_region
      %111 = dma.done [#allocation8], 2048
    $region65: #{tpu_custom_call.1} parent=1 // pred_fallthru
      _
    // Predicated region
    $region66: #{tpu_custom_call.1} parent=1 // pred_check
      _
    $region67: #{tpu_custom_call.1} parent=1 // pred_check_branch
      %113 = sbr.rel (0) target = $region69
    $region68: #{tpu_custom_call.1} parent=1 // pred_region
      %114 = dma.done [#allocation8], 4096
    $region69: #{tpu_custom_call.1} parent=1 // pred_fallthru
      _
    // Predicated region
    $region70: #{tpu_custom_call.1} parent=1 // pred_check
      _
    $region71: #{tpu_custom_call.1} parent=1 // pred_check_branch
      %116 = sbr.rel (0) target = $region73
    $region72: #{tpu_custom_call.1} parent=1 // pred_region
      %117 = dma.done [#allocation11], 4096
    $region73: #{tpu_custom_call.1} parent=1 // pred_fallthru
      _
    // Predicated region
    $region74: #{tpu_custom_call.1} parent=1 // pred_check
      _
    $region75: #{tpu_custom_call.1} parent=1 // pred_check_branch
      %119 = sbr.rel (0) target = $region77
    $region76: #{tpu_custom_call.1} parent=1 // pred_region
      %120 = dma.done [#allocation11], 2048
    $region77: #{tpu_custom_call.1} parent=1 // pred_fallthru
      _
    %v121 = vld [vmem:[#allocation4] sm:$0xff]
    %v122 = vld [vmem:[#allocation4 + $0x8] sm:$0xff]
    %v123 = vld [vmem:[#allocation4 + $0x10] sm:$0xff]
    %v124 = vld [vmem:[#allocation4 + $0x18] sm:$0xff]
    %v125 = vld [vmem:[#allocation4 + $0x20] sm:$0xff]
    %v126 = vld [vmem:[#allocation4 + $0x28] sm:$0xff]
    %v127 = vld [vmem:[#allocation4 + $0x30] sm:$0xff]
    %v128 = vld [vmem:[#allocation4 + $0x38] sm:$0xff]
    %v129 = vld [vmem:[#allocation4 + $0x40] sm:$0xff]
    %v130 = vld [vmem:[#allocation4 + $0x48] sm:$0xff]
    %v131 = vld [vmem:[#allocation4 + $0x50] sm:$0xff]
    %v132 = vld [vmem:[#allocation4 + $0x58] sm:$0xff]
    %v133 = vld [vmem:[#allocation4 + $0x60] sm:$0xff]
    %v134 = vld [vmem:[#allocation4 + $0x68] sm:$0xff]
    %v135 = vld [vmem:[#allocation4 + $0x70] sm:$0xff]
    %v136 = vld [vmem:[#allocation4 + $0x78] sm:$0xff]
    %v137 = vld [vmem:[#allocation7] sm:$0xff]
    %v138 = vld [vmem:[#allocation7 + $0x8] sm:$0xff]
    %v139 = vld [vmem:[#allocation7 + $0x10] sm:$0xff]
    %v140 = vld [vmem:[#allocation7 + $0x18] sm:$0xff]
    %v141 = vld [vmem:[#allocation7 + $0x20] sm:$0xff]
    %v142 = vld [vmem:[#allocation7 + $0x28] sm:$0xff]
    %v143 = vld [vmem:[#allocation7 + $0x30] sm:$0xff]
    %v144 = vld [vmem:[#allocation7 + $0x38] sm:$0xff]
    %v145 = vld [vmem:[#allocation7 + $0x40] sm:$0xff]
    %v146 = vld [vmem:[#allocation7 + $0x48] sm:$0xff]
    %v147 = vld [vmem:[#allocation7 + $0x50] sm:$0xff]
    %v148 = vld [vmem:[#allocation7 + $0x58] sm:$0xff]
    %v149 = vld [vmem:[#allocation7 + $0x60] sm:$0xff]
    %v150 = vld [vmem:[#allocation7 + $0x68] sm:$0xff]
    %v151 = vld [vmem:[#allocation7 + $0x70] sm:$0xff]
    %v152 = vld [vmem:[#allocation7 + $0x78] sm:$0xff]
    %s153 = sld [smem:[#allocation2]]
    %154 = vmatprep.subr.mxu0 0.0
    %155 = vmatpush1.msra.mxu0 %v137
    %156 = vmatprep.subr.mxu0 0.0
    %157 = vmatpush1.msra.mxu0 %v138
    %158 = vmatprep.subr.mxu0 0.0
    %159 = vmatpush1.msra.mxu0 %v139
    %160 = vmatprep.subr.mxu0 0.0
    %161 = vmatpush1.msra.mxu0 %v140
    %162 = vmatprep.subr.mxu0 0.0
    %163 = vmatpush1.msra.mxu0 %v141
    %164 = vmatprep.subr.mxu0 0.0
    %165 = vmatpush1.msra.mxu0 %v142
    %166 = vmatprep.subr.mxu0 0.0
    %167 = vmatpush1.msra.mxu0 %v143
    %168 = vmatprep.subr.mxu0 0.0
    %169 = vmatpush1.msra.mxu0 %v144
    %170 = vmatprep.subr.mxu0 0.0
    %171 = vmatpush1.msra.mxu0 %v145
    %172 = vmatprep.subr.mxu0 0.0
    %173 = vmatpush1.msra.mxu0 %v146
    %174 = vmatprep.subr.mxu0 0.0
    %175 = vmatpush1.msra.mxu0 %v147
    %176 = vmatprep.subr.mxu0 0.0
    %177 = vmatpush1.msra.mxu0 %v148
    %178 = vmatprep.subr.mxu0 0.0
    %179 = vmatpush1.msra.mxu0 %v149
    %180 = vmatprep.subr.mxu0 0.0
    %181 = vmatpush1.msra.mxu0 %v150
    %182 = vmatprep.subr.mxu0 0.0
    %183 = vmatpush1.msra.mxu0 %v151
    %184 = vmatprep.subr.mxu0 0.0
    %185 = vmatpush1.msra.mxu0 %v152
    %186 = vmatprep.subr.mxu0 0.0
    %187 = vmatpush1.msra.mxu0 0.0
    %188 = vmatprep.subr.mxu0 0.0
    %189 = vmatpush1.msra.mxu0 0.0
    %190 = vmatprep.subr.mxu0 0.0
    %191 = vmatpush1.msra.mxu0 0.0
    %192 = vmatprep.subr.mxu0 0.0
    %193 = vmatpush1.msra.mxu0 0.0
    %194 = vmatprep.subr.mxu0 0.0
    %195 = vmatpush1.msra.mxu0 0.0
    %196 = vmatprep.subr.mxu0 0.0
    %197 = vmatpush1.msra.mxu0 0.0
    %198 = vmatprep.subr.mxu0 0.0
    %199 = vmatpush1.msra.mxu0 0.0
    %200 = vmatprep.subr.mxu0 0.0
    %201 = vmatpush1.msra.mxu0 0.0
    %202 = vmatprep.subr.mxu0 0.0
    %203 = vmatpush1.msra.mxu0 0.0
    %204 = vmatprep.subr.mxu0 0.0
    %205 = vmatpush1.msra.mxu0 0.0
    %206 = vmatprep.subr.mxu0 0.0
    %207 = vmatpush1.msra.mxu0 0.0
    %208 = vmatprep.subr.mxu0 0.0
    %209 = vmatpush1.msra.mxu0 0.0
    %210 = vmatprep.subr.mxu0 0.0
    %211 = vmatpush1.msra.mxu0 0.0
    %212 = vmatprep.subr.mxu0 0.0
    %213 = vmatpush1.msra.mxu0 0.0
    %214 = vmatprep.subr.mxu0 0.0
    %215 = vmatpush1.msra.mxu0 0.0
    %216 = vmatprep.subr.mxu0 0.0
    %217 = vmatpush1.msra.mxu0 0.0
    %218 = vmatprep.mubr.f32.mxu0 0.0
    %219 = vmatmul.mubr.f32.gmra.mrb[0].mxu0 %v121
    %v220 = vpop.f32.mrb[0].mxu0
    %v221 = vadd.f32 0.0, %v220
    %v222 = vpop.f32.mrb[0].mxu0
    %223 = vmatprep.mubr.f32.mxu0 0.0
    %224 = vmatmul.mubr.f32.gmra.mrb[0].mxu0 %v122
    %v225 = vpop.f32.mrb[0].mxu0
    %v226 = vadd.f32 0.0, %v225
    %v227 = vpop.f32.mrb[0].mxu0
    %228 = vmatprep.mubr.f32.mxu0 0.0
    %229 = vmatmul.mubr.f32.gmra.mrb[0].mxu0 %v123
    %v230 = vpop.f32.mrb[0].mxu0
    %v231 = vadd.f32 0.0, %v230
    %v232 = vpop.f32.mrb[0].mxu0
    %233 = vmatprep.mubr.f32.mxu0 0.0
    %234 = vmatmul.mubr.f32.gmra.mrb[0].mxu0 %v124
    %v235 = vpop.f32.mrb[0].mxu0
    %v236 = vadd.f32 0.0, %v235
    %v237 = vpop.f32.mrb[0].mxu0
    %238 = vmatprep.mubr.f32.mxu0 0.0
    %239 = vmatmul.mubr.f32.gmra.mrb[0].mxu0 %v125
    %v240 = vpop.f32.mrb[0].mxu0
    %v241 = vadd.f32 0.0, %v240
    %v242 = vpop.f32.mrb[0].mxu0
    %243 = vmatprep.mubr.f32.mxu0 0.0
    %244 = vmatmul.mubr.f32.gmra.mrb[0].mxu0 %v126
    %v245 = vpop.f32.mrb[0].mxu0
    %v246 = vadd.f32 0.0, %v245
    %v247 = vpop.f32.mrb[0].mxu0
    %248 = vmatprep.mubr.f32.mxu0 0.0
    %249 = vmatmul.mubr.f32.gmra.mrb[0].mxu0 %v127
    %v250 = vpop.f32.mrb[0].mxu0
    %v251 = vadd.f32 0.0, %v250
    %v252 = vpop.f32.mrb[0].mxu0
    %253 = vmatprep.mubr.f32.mxu0 0.0
    %254 = vmatmul.mubr.f32.gmra.mrb[0].mxu0 %v128
    %v255 = vpop.f32.mrb[0].mxu0
    %v256 = vadd.f32 0.0, %v255
    %v257 = vpop.f32.mrb[0].mxu0
    %258 = vmatprep.mubr.f32.mxu0 0.0
    %259 = vmatmul.mubr.f32.gmra.mrb[0].mxu0 %v129
    %v260 = vpop.f32.mrb[0].mxu0
    %v261 = vadd.f32 0.0, %v260
    %v262 = vpop.f32.mrb[0].mxu0
    %263 = vmatprep.mubr.f32.mxu0 0.0
    %264 = vmatmul.mubr.f32.gmra.mrb[0].mxu0 %v130
    %v265 = vpop.f32.mrb[0].mxu0
    %v266 = vadd.f32 0.0, %v265
    %v267 = vpop.f32.mrb[0].mxu0
    %268 = vmatprep.mubr.f32.mxu0 0.0
    %269 = vmatmul.mubr.f32.gmra.mrb[0].mxu0 %v131
    %v270 = vpop.f32.mrb[0].mxu0
    %v271 = vadd.f32 0.0, %v270
    %v272 = vpop.f32.mrb[0].mxu0
    %273 = vmatprep.mubr.f32.mxu0 0.0
    %274 = vmatmul.mubr.f32.gmra.mrb[0].mxu0 %v132
    %v275 = vpop.f32.mrb[0].mxu0
    %v276 = vadd.f32 0.0, %v275
    %v277 = vpop.f32.mrb[0].mxu0
    %278 = vmatprep.mubr.f32.mxu0 0.0
    %279 = vmatmul.mubr.f32.gmra.mrb[0].mxu0 %v133
    %v280 = vpop.f32.mrb[0].mxu0
    %v281 = vadd.f32 0.0, %v280
    %v282 = vpop.f32.mrb[0].mxu0
    %283 = vmatprep.mubr.f32.mxu0 0.0
    %284 = vmatmul.mubr.f32.gmra.mrb[0].mxu0 %v134
    %v285 = vpop.f32.mrb[0].mxu0
    %v286 = vadd.f32 0.0, %v285
    %v287 = vpop.f32.mrb[0].mxu0
    %288 = vmatprep.mubr.f32.mxu0 0.0
    %289 = vmatmul.mubr.f32.gmra.mrb[0].mxu0 %v135
    %v290 = vpop.f32.mrb[0].mxu0
    %v291 = vadd.f32 0.0, %v290
    %v292 = vpop.f32.mrb[0].mxu0
    %293 = vmatprep.mubr.f32.mxu0 0.0
    %294 = vmatmul.mubr.f32.gmra.mrb[0].mxu0 %v136
    %v295 = vpop.f32.mrb[0].mxu0
    %v296 = vadd.f32 0.0, %v295
    %v297 = vpop.f32.mrb[0].mxu0
    %298 = vdwg.mxu0
    %v299 = vld [vmem:[#allocation9] sm:$0xff]
    %v300 = vld [vmem:[#allocation9 + $0x8] sm:$0xff]
    %v301 = vld [vmem:[#allocation9 + $0x10] sm:$0xff]
    %v302 = vld [vmem:[#allocation9 + $0x18] sm:$0xff]
    %v303 = vld [vmem:[#allocation9 + $0x20] sm:$0xff]
    %v304 = vld [vmem:[#allocation9 + $0x28] sm:$0xff]
    %v305 = vld [vmem:[#allocation9 + $0x30] sm:$0xff]
    %v306 = vld [vmem:[#allocation9 + $0x38] sm:$0xff]
    %v307 = vld [vmem:[#allocation9 + $0x40] sm:$0xff]
    %v308 = vld [vmem:[#allocation9 + $0x48] sm:$0xff]
    %v309 = vld [vmem:[#allocation9 + $0x50] sm:$0xff]
    %v310 = vld [vmem:[#allocation9 + $0x58] sm:$0xff]
    %v311 = vld [vmem:[#allocation9 + $0x60] sm:$0xff]
    %v312 = vld [vmem:[#allocation9 + $0x68] sm:$0xff]
    %v313 = vld [vmem:[#allocation9 + $0x70] sm:$0xff]
    %v314 = vld [vmem:[#allocation9 + $0x78] sm:$0xff]
    %v315 = vld [vmem:[%s3] sm:$0x1]
    %v317 = vlaneseq
    %v318 = vshrl.u32 %v317, 7
    %v319 = vsub.s32 0, %v318
    %v320 = vrot.slane %v315, %v319
    %322 = vmatprep.subr.mxu0 0.0
    %323 = vmatpush1.msra.mxu0 %v299
    %324 = vmatprep.subr.mxu0 0.0
    %325 = vmatpush1.msra.mxu0 %v300
    %326 = vmatprep.subr.mxu0 0.0
    %327 = vmatpush1.msra.mxu0 %v301
    %328 = vmatprep.subr.mxu0 0.0
    %329 = vmatpush1.msra.mxu0 %v302
    %330 = vmatprep.subr.mxu0 0.0
    %331 = vmatpush1.msra.mxu0 %v303
    %332 = vmatprep.subr.mxu0 0.0
    %333 = vmatpush1.msra.mxu0 %v304
    %334 = vmatprep.subr.mxu0 0.0
    %335 = vmatpush1.msra.mxu0 %v305
    %336 = vmatprep.subr.mxu0 0.0
    %337 = vmatpush1.msra.mxu0 %v306
    %338 = vmatprep.subr.mxu0 0.0
    %339 = vmatpush1.msra.mxu0 %v307
    %340 = vmatprep.subr.mxu0 0.0
    %341 = vmatpush1.msra.mxu0 %v308
    %342 = vmatprep.subr.mxu0 0.0
    %343 = vmatpush1.msra.mxu0 %v309
    %344 = vmatprep.subr.mxu0 0.0
    %345 = vmatpush1.msra.mxu0 %v310
    %346 = vmatprep.subr.mxu0 0.0
    %347 = vmatpush1.msra.mxu0 %v311
    %348 = vmatprep.subr.mxu0 0.0
    %349 = vmatpush1.msra.mxu0 %v312
    %350 = vmatprep.subr.mxu0 0.0
    %351 = vmatpush1.msra.mxu0 %v313
    %352 = vmatprep.subr.mxu0 0.0
    %353 = vmatpush1.msra.mxu0 %v314
    %354 = vmatprep.subr.mxu0 0.0
    %355 = vmatpush1.msra.mxu0 0.0
    %356 = vmatprep.subr.mxu0 0.0
    %357 = vmatpush1.msra.mxu0 0.0
    %358 = vmatprep.subr.mxu0 0.0
    %359 = vmatpush1.msra.mxu0 0.0
    %360 = vmatprep.subr.mxu0 0.0
    %361 = vmatpush1.msra.mxu0 0.0
    %362 = vmatprep.subr.mxu0 0.0
    %363 = vmatpush1.msra.mxu0 0.0
    %364 = vmatprep.subr.mxu0 0.0
    %365 = vmatpush1.msra.mxu0 0.0
    %366 = vmatprep.subr.mxu0 0.0
    %367 = vmatpush1.msra.mxu0 0.0
    %368 = vmatprep.subr.mxu0 0.0
    %369 = vmatpush1.msra.mxu0 0.0
    %370 = vmatprep.subr.mxu0 0.0
    %371 = vmatpush1.msra.mxu0 0.0
    %372 = vmatprep.subr.mxu0 0.0
    %373 = vmatpush1.msra.mxu0 0.0
    %374 = vmatprep.subr.mxu0 0.0
    %375 = vmatpush1.msra.mxu0 0.0
    %376 = vmatprep.subr.mxu0 0.0
    %377 = vmatpush1.msra.mxu0 0.0
    %378 = vmatprep.subr.mxu0 0.0
    %379 = vmatpush1.msra.mxu0 0.0
    %380 = vmatprep.subr.mxu0 0.0
    %381 = vmatpush1.msra.mxu0 0.0
    %382 = vmatprep.subr.mxu0 0.0
    %383 = vmatpush1.msra.mxu0 0.0
    %384 = vmatprep.subr.mxu0 0.0
    %385 = vmatpush1.msra.mxu0 0.0
    %386 = vmatprep.mubr.f32.mxu0 0.0
    %387 = vmatmul.mubr.f32.gmra.mrb[0].mxu0 %v221
    %v388 = vpop.f32.mrb[0].mxu0
    %v389 = vadd.f32 %v320, %v388
    %v390 = vpop.f32.mrb[0].mxu0
    %391 = vmatprep.mubr.f32.mxu0 0.0
    %392 = vmatmul.mubr.f32.gmra.mrb[0].mxu0 %v226
    %v393 = vpop.f32.mrb[0].mxu0
    %v394 = vadd.f32 %v320, %v393
    %v395 = vpop.f32.mrb[0].mxu0
    %396 = vmatprep.mubr.f32.mxu0 0.0
    %397 = vmatmul.mubr.f32.gmra.mrb[0].mxu0 %v231
    %v398 = vpop.f32.mrb[0].mxu0
    %v399 = vadd.f32 %v320, %v398
    %v400 = vpop.f32.mrb[0].mxu0
    %401 = vmatprep.mubr.f32.mxu0 0.0
    %402 = vmatmul.mubr.f32.gmra.mrb[0].mxu0 %v236
    %v403 = vpop.f32.mrb[0].mxu0
    %v404 = vadd.f32 %v320, %v403
    %v405 = vpop.f32.mrb[0].mxu0
    %406 = vmatprep.mubr.f32.mxu0 0.0
    %407 = vmatmul.mubr.f32.gmra.mrb[0].mxu0 %v241
    %v408 = vpop.f32.mrb[0].mxu0
    %v409 = vadd.f32 %v320, %v408
    %v410 = vpop.f32.mrb[0].mxu0
    %411 = vmatprep.mubr.f32.mxu0 0.0
    %412 = vmatmul.mubr.f32.gmra.mrb[0].mxu0 %v246
    %v413 = vpop.f32.mrb[0].mxu0
    %v414 = vadd.f32 %v320, %v413
    %v415 = vpop.f32.mrb[0].mxu0
    %416 = vmatprep.mubr.f32.mxu0 0.0
    %417 = vmatmul.mubr.f32.gmra.mrb[0].mxu0 %v251
    %v418 = vpop.f32.mrb[0].mxu0
    %v419 = vadd.f32 %v320, %v418
    %v420 = vpop.f32.mrb[0].mxu0
    %421 = vmatprep.mubr.f32.mxu0 0.0
    %422 = vmatmul.mubr.f32.gmra.mrb[0].mxu0 %v256
    %v423 = vpop.f32.mrb[0].mxu0
    %v424 = vadd.f32 %v320, %v423
    %v425 = vpop.f32.mrb[0].mxu0
    %426 = vmatprep.mubr.f32.mxu0 0.0
    %427 = vmatmul.mubr.f32.gmra.mrb[0].mxu0 %v261
    %v428 = vpop.f32.mrb[0].mxu0
    %v429 = vadd.f32 %v320, %v428
    %v430 = vpop.f32.mrb[0].mxu0
    %431 = vmatprep.mubr.f32.mxu0 0.0
    %432 = vmatmul.mubr.f32.gmra.mrb[0].mxu0 %v266
    %v433 = vpop.f32.mrb[0].mxu0
    %v434 = vadd.f32 %v320, %v433
    %v435 = vpop.f32.mrb[0].mxu0
    %436 = vmatprep.mubr.f32.mxu0 0.0
    %437 = vmatmul.mubr.f32.gmra.mrb[0].mxu0 %v271
    %v438 = vpop.f32.mrb[0].mxu0
    %v439 = vadd.f32 %v320, %v438
    %v440 = vpop.f32.mrb[0].mxu0
    %441 = vmatprep.mubr.f32.mxu0 0.0
    %442 = vmatmul.mubr.f32.gmra.mrb[0].mxu0 %v276
    %v443 = vpop.f32.mrb[0].mxu0
    %v444 = vadd.f32 %v320, %v443
    %v445 = vpop.f32.mrb[0].mxu0
    %446 = vmatprep.mubr.f32.mxu0 0.0
    %447 = vmatmul.mubr.f32.gmra.mrb[0].mxu0 %v281
    %v448 = vpop.f32.mrb[0].mxu0
    %v449 = vadd.f32 %v320, %v448
    %v450 = vpop.f32.mrb[0].mxu0
    %451 = vmatprep.mubr.f32.mxu0 0.0
    %452 = vmatmul.mubr.f32.gmra.mrb[0].mxu0 %v286
    %v453 = vpop.f32.mrb[0].mxu0
    %v454 = vadd.f32 %v320, %v453
    %v455 = vpop.f32.mrb[0].mxu0
    %456 = vmatprep.mubr.f32.mxu0 0.0
    %457 = vmatmul.mubr.f32.gmra.mrb[0].mxu0 %v291
    %v458 = vpop.f32.mrb[0].mxu0
    %v459 = vadd.f32 %v320, %v458
    %v460 = vpop.f32.mrb[0].mxu0
    %461 = vmatprep.mubr.f32.mxu0 0.0
    %462 = vmatmul.mubr.f32.gmra.mrb[0].mxu0 %v296
    %v463 = vpop.f32.mrb[0].mxu0
    %v464 = vadd.f32 %v320, %v463
    %v465 = vpop.f32.mrb[0].mxu0
    %466 = vdwg.mxu0
    %v467 = vmax.f32 %v389, 0.0
    %v468 = vmax.f32 %v394, 0.0
    %v469 = vmax.f32 %v399, 0.0
    %v470 = vmax.f32 %v404, 0.0
    %v471 = vmax.f32 %v409, 0.0
    %v472 = vmax.f32 %v414, 0.0
    %v473 = vmax.f32 %v419, 0.0
    %v474 = vmax.f32 %v424, 0.0
    %v475 = vmax.f32 %v429, 0.0
    %v476 = vmax.f32 %v434, 0.0
    %v477 = vmax.f32 %v439, 0.0
    %v478 = vmax.f32 %v444, 0.0
    %v479 = vmax.f32 %v449, 0.0
    %v480 = vmax.f32 %v454, 0.0
    %v481 = vmax.f32 %v459, 0.0
    %v482 = vmax.f32 %v464, 0.0
    %v483 = vld [vmem:[#allocation10] sm:$0xff]
    %v484 = vld [vmem:[#allocation10 + $0x8] sm:$0xff]
    %v485 = vld [vmem:[#allocation10 + $0x10] sm:$0xff]
    %v486 = vld [vmem:[#allocation10 + $0x18] sm:$0xff]
    %v487 = vld [vmem:[#allocation10 + $0x20] sm:$0xff]
    %v488 = vld [vmem:[#allocation10 + $0x28] sm:$0xff]
    %v489 = vld [vmem:[#allocation10 + $0x30] sm:$0xff]
    %v490 = vld [vmem:[#allocation10 + $0x38] sm:$0xff]
    %v491 = vld [vmem:[#allocation10 + $0x40] sm:$0xff]
    %v492 = vld [vmem:[#allocation10 + $0x48] sm:$0xff]
    %v493 = vld [vmem:[#allocation10 + $0x50] sm:$0xff]
    %v494 = vld [vmem:[#allocation10 + $0x58] sm:$0xff]
    %v495 = vld [vmem:[#allocation10 + $0x60] sm:$0xff]
    %v496 = vld [vmem:[#allocation10 + $0x68] sm:$0xff]
    %v497 = vld [vmem:[#allocation10 + $0x70] sm:$0xff]
    %v498 = vld [vmem:[#allocation10 + $0x78] sm:$0xff]
    %v499 = vld [vmem:[%s5] sm:$0x1]
    %v501 = vlaneseq
    %v502 = vshrl.u32 %v501, 7
    %v503 = vsub.s32 0, %v502
    %v504 = vrot.slane %v499, %v503
    %506 = vmatprep.subr.mxu0 0.0
    %507 = vmatpush1.msra.mxu0 %v483
    %508 = vmatprep.subr.mxu0 0.0
    %509 = vmatpush1.msra.mxu0 %v484
    %510 = vmatprep.subr.mxu0 0.0
    %511 = vmatpush1.msra.mxu0 %v485
    %512 = vmatprep.subr.mxu0 0.0
    %513 = vmatpush1.msra.mxu0 %v486
    %514 = vmatprep.subr.mxu0 0.0
    %515 = vmatpush1.msra.mxu0 %v487
    %516 = vmatprep.subr.mxu0 0.0
    %517 = vmatpush1.msra.mxu0 %v488
    %518 = vmatprep.subr.mxu0 0.0
    %519 = vmatpush1.msra.mxu0 %v489
    %520 = vmatprep.subr.mxu0 0.0
    %521 = vmatpush1.msra.mxu0 %v490
    %522 = vmatprep.subr.mxu0 0.0
    %523 = vmatpush1.msra.mxu0 %v491
    %524 = vmatprep.subr.mxu0 0.0
    %525 = vmatpush1.msra.mxu0 %v492
    %526 = vmatprep.subr.mxu0 0.0
    %527 = vmatpush1.msra.mxu0 %v493
    %528 = vmatprep.subr.mxu0 0.0
    %529 = vmatpush1.msra.mxu0 %v494
    %530 = vmatprep.subr.mxu0 0.0
    %531 = vmatpush1.msra.mxu0 %v495
    %532 = vmatprep.subr.mxu0 0.0
    %533 = vmatpush1.msra.mxu0 %v496
    %534 = vmatprep.subr.mxu0 0.0
    %535 = vmatpush1.msra.mxu0 %v497
    %536 = vmatprep.subr.mxu0 0.0
    %537 = vmatpush1.msra.mxu0 %v498
    %538 = vmatprep.subr.mxu0 0.0
    %539 = vmatpush1.msra.mxu0 0.0
    %540 = vmatprep.subr.mxu0 0.0
    %541 = vmatpush1.msra.mxu0 0.0
    %542 = vmatprep.subr.mxu0 0.0
    %543 = vmatpush1.msra.mxu0 0.0
    %544 = vmatprep.subr.mxu0 0.0
    %545 = vmatpush1.msra.mxu0 0.0
    %546 = vmatprep.subr.mxu0 0.0
    %547 = vmatpush1.msra.mxu0 0.0
    %548 = vmatprep.subr.mxu0 0.0
    %549 = vmatpush1.msra.mxu0 0.0
    %550 = vmatprep.subr.mxu0 0.0
    %551 = vmatpush1.msra.mxu0 0.0
    %552 = vmatprep.subr.mxu0 0.0
    %553 = vmatpush1.msra.mxu0 0.0
    %554 = vmatprep.subr.mxu0 0.0
    %555 = vmatpush1.msra.mxu0 0.0
    %556 = vmatprep.subr.mxu0 0.0
    %557 = vmatpush1.msra.mxu0 0.0
    %558 = vmatprep.subr.mxu0 0.0
    %559 = vmatpush1.msra.mxu0 0.0
    %560 = vmatprep.subr.mxu0 0.0
    %561 = vmatpush1.msra.mxu0 0.0
    %562 = vmatprep.subr.mxu0 0.0
    %563 = vmatpush1.msra.mxu0 0.0
    %564 = vmatprep.subr.mxu0 0.0
    %565 = vmatpush1.msra.mxu0 0.0
    %566 = vmatprep.subr.mxu0 0.0
    %567 = vmatpush1.msra.mxu0 0.0
    %568 = vmatprep.subr.mxu0 0.0
    %569 = vmatpush1.msra.mxu0 0.0
    %570 = vmatprep.mubr.f32.mxu0 0.0
    %571 = vmatmul.mubr.f32.gmra.mrb[0].mxu0 %v467
    %v572 = vpop.f32.mrb[0].mxu0
    %v573 = vadd.f32 %v504, %v572
    %v574 = vpop.f32.mrb[0].mxu0
    %575 = vmatprep.mubr.f32.mxu0 0.0
    %576 = vmatmul.mubr.f32.gmra.mrb[0].mxu0 %v468
    %v577 = vpop.f32.mrb[0].mxu0
    %v578 = vadd.f32 %v504, %v577
    %v579 = vpop.f32.mrb[0].mxu0
    %580 = vmatprep.mubr.f32.mxu0 0.0
    %581 = vmatmul.mubr.f32.gmra.mrb[0].mxu0 %v469
    %v582 = vpop.f32.mrb[0].mxu0
    %v583 = vadd.f32 %v504, %v582
    %v584 = vpop.f32.mrb[0].mxu0
    %585 = vmatprep.mubr.f32.mxu0 0.0
    %586 = vmatmul.mubr.f32.gmra.mrb[0].mxu0 %v470
    %v587 = vpop.f32.mrb[0].mxu0
    %v588 = vadd.f32 %v504, %v587
    %v589 = vpop.f32.mrb[0].mxu0
    %590 = vmatprep.mubr.f32.mxu0 0.0
    %591 = vmatmul.mubr.f32.gmra.mrb[0].mxu0 %v471
    %v592 = vpop.f32.mrb[0].mxu0
    %v593 = vadd.f32 %v504, %v592
    %v594 = vpop.f32.mrb[0].mxu0
    %595 = vmatprep.mubr.f32.mxu0 0.0
    %596 = vmatmul.mubr.f32.gmra.mrb[0].mxu0 %v472
    %v597 = vpop.f32.mrb[0].mxu0
    %v598 = vadd.f32 %v504, %v597
    %v599 = vpop.f32.mrb[0].mxu0
    %600 = vmatprep.mubr.f32.mxu0 0.0
    %601 = vmatmul.mubr.f32.gmra.mrb[0].mxu0 %v473
    %v602 = vpop.f32.mrb[0].mxu0
    %v603 = vadd.f32 %v504, %v602
    %v604 = vpop.f32.mrb[0].mxu0
    %605 = vmatprep.mubr.f32.mxu0 0.0
    %606 = vmatmul.mubr.f32.gmra.mrb[0].mxu0 %v474
    %v607 = vpop.f32.mrb[0].mxu0
    %v608 = vadd.f32 %v504, %v607
    %v609 = vpop.f32.mrb[0].mxu0
    %610 = vmatprep.mubr.f32.mxu0 0.0
    %611 = vmatmul.mubr.f32.gmra.mrb[0].mxu0 %v475
    %v612 = vpop.f32.mrb[0].mxu0
    %v613 = vadd.f32 %v504, %v612
    %v614 = vpop.f32.mrb[0].mxu0
    %615 = vmatprep.mubr.f32.mxu0 0.0
    %616 = vmatmul.mubr.f32.gmra.mrb[0].mxu0 %v476
    %v617 = vpop.f32.mrb[0].mxu0
    %v618 = vadd.f32 %v504, %v617
    %v619 = vpop.f32.mrb[0].mxu0
    %620 = vmatprep.mubr.f32.mxu0 0.0
    %621 = vmatmul.mubr.f32.gmra.mrb[0].mxu0 %v477
    %v622 = vpop.f32.mrb[0].mxu0
    %v623 = vadd.f32 %v504, %v622
    %v624 = vpop.f32.mrb[0].mxu0
    %625 = vmatprep.mubr.f32.mxu0 0.0
    %626 = vmatmul.mubr.f32.gmra.mrb[0].mxu0 %v478
    %v627 = vpop.f32.mrb[0].mxu0
    %v628 = vadd.f32 %v504, %v627
    %v629 = vpop.f32.mrb[0].mxu0
    %630 = vmatprep.mubr.f32.mxu0 0.0
    %631 = vmatmul.mubr.f32.gmra.mrb[0].mxu0 %v479
    %v632 = vpop.f32.mrb[0].mxu0
    %v633 = vadd.f32 %v504, %v632
    %v634 = vpop.f32.mrb[0].mxu0
    %635 = vmatprep.mubr.f32.mxu0 0.0
    %636 = vmatmul.mubr.f32.gmra.mrb[0].mxu0 %v480
    %v637 = vpop.f32.mrb[0].mxu0
    %v638 = vadd.f32 %v504, %v637
    %v639 = vpop.f32.mrb[0].mxu0
    %640 = vmatprep.mubr.f32.mxu0 0.0
    %641 = vmatmul.mubr.f32.gmra.mrb[0].mxu0 %v481
    %v642 = vpop.f32.mrb[0].mxu0
    %v643 = vadd.f32 %v504, %v642
    %v644 = vpop.f32.mrb[0].mxu0
    %645 = vmatprep.mubr.f32.mxu0 0.0
    %646 = vmatmul.mubr.f32.gmra.mrb[0].mxu0 %v482
    %v647 = vpop.f32.mrb[0].mxu0
    %v648 = vadd.f32 %v504, %v647
    %v649 = vpop.f32.mrb[0].mxu0
    %650 = vdwg.mxu0
    %vm651 = vcmp.ge.f32.partialorder %v573, 0.0
    %vm652 = vcmp.ge.f32.partialorder %v578, 0.0
    %vm653 = vcmp.ge.f32.partialorder %v583, 0.0
    %vm654 = vcmp.ge.f32.partialorder %v588, 0.0
    %vm655 = vcmp.ge.f32.partialorder %v593, 0.0
    %vm656 = vcmp.ge.f32.partialorder %v598, 0.0
    %vm657 = vcmp.ge.f32.partialorder %v603, 0.0
    %vm658 = vcmp.ge.f32.partialorder %v608, 0.0
    %vm659 = vcmp.ge.f32.partialorder %v613, 0.0
    %vm660 = vcmp.ge.f32.partialorder %v618, 0.0
    %vm661 = vcmp.ge.f32.partialorder %v623, 0.0
    %vm662 = vcmp.ge.f32.partialorder %v628, 0.0
    %vm663 = vcmp.ge.f32.partialorder %v633, 0.0
    %vm664 = vcmp.ge.f32.partialorder %v638, 0.0
    %vm665 = vcmp.ge.f32.partialorder %v643, 0.0
    %vm666 = vcmp.ge.f32.partialorder %v648, 0.0
    %v667 = vstv %s153
    %v668 = vmul.f32 %v667, %v573
    %v669 = vmul.f32 %v667, %v578
    %v670 = vmul.f32 %v667, %v583
    %v671 = vmul.f32 %v667, %v588
    %v672 = vmul.f32 %v667, %v593
    %v673 = vmul.f32 %v667, %v598
    %v674 = vmul.f32 %v667, %v603
    %v675 = vmul.f32 %v667, %v608
    %v676 = vmul.f32 %v667, %v613
    %v677 = vmul.f32 %v667, %v618
    %v678 = vmul.f32 %v667, %v623
    %v679 = vmul.f32 %v667, %v628
    %v680 = vmul.f32 %v667, %v633
    %v681 = vmul.f32 %v667, %v638
    %v682 = vmul.f32 %v667, %v643
    %v683 = vmul.f32 %v667, %v648
    %v684 = vsel %vm651, %v573, %v668
    %v685 = vsel %vm652, %v578, %v669
    %v686 = vsel %vm653, %v583, %v670
    %v687 = vsel %vm654, %v588, %v671
    %v688 = vsel %vm655, %v593, %v672
    %v689 = vsel %vm656, %v598, %v673
    %v690 = vsel %vm657, %v603, %v674
    %v691 = vsel %vm658, %v608, %v675
    %v692 = vsel %vm659, %v613, %v676
    %v693 = vsel %vm660, %v618, %v677
    %v694 = vsel %vm661, %v623, %v678
    %v695 = vsel %vm662, %v628, %v679
    %v696 = vsel %vm663, %v633, %v680
    %v697 = vsel %vm664, %v638, %v681
    %v698 = vsel %vm665, %v643, %v682
    %v699 = vsel %vm666, %v648, %v683
    %700 = vmatprep.subr.mxu0 0.0
    %701 = vmatpush1.msra.mxu0 %v684
    %702 = vmatprep.subr.mxu0 0.0
    %703 = vmatpush1.msra.mxu0 %v685
    %704 = vmatprep.subr.mxu0 0.0
    %705 = vmatpush1.msra.mxu0 %v686
    %706 = vmatprep.subr.mxu0 0.0
    %707 = vmatpush1.msra.mxu0 %v687
    %708 = vmatprep.subr.mxu0 0.0
    %709 = vmatpush1.msra.mxu0 %v688
    %710 = vmatprep.subr.mxu0 0.0
    %711 = vmatpush1.msra.mxu0 %v689
    %712 = vmatprep.subr.mxu0 0.0
    %713 = vmatpush1.msra.mxu0 %v690
    %714 = vmatprep.subr.mxu0 0.0
    %715 = vmatpush1.msra.mxu0 %v691
    %716 = vmatprep.subr.mxu0 0.0
    %717 = vmatpush1.msra.mxu0 %v692
    %718 = vmatprep.subr.mxu0 0.0
    %719 = vmatpush1.msra.mxu0 %v693
    %720 = vmatprep.subr.mxu0 0.0
    %721 = vmatpush1.msra.mxu0 %v694
    %722 = vmatprep.subr.mxu0 0.0
    %723 = vmatpush1.msra.mxu0 %v695
    %724 = vmatprep.subr.mxu0 0.0
    %725 = vmatpush1.msra.mxu0 %v696
    %726 = vmatprep.subr.mxu0 0.0
    %727 = vmatpush1.msra.mxu0 %v697
    %728 = vmatprep.subr.mxu0 0.0
    %729 = vmatpush1.msra.mxu0 %v698
    %730 = vmatprep.subr.mxu0 0.0
    %731 = vmatpush1.msra.mxu0 %v699
    %732 = vmatprep.subr.mxu0 0.0
    %733 = vmatpush1.msra.mxu0 0.0
    %734 = vmatprep.subr.mxu0 0.0
    %735 = vmatpush1.msra.mxu0 0.0
    %736 = vmatprep.subr.mxu0 0.0
    %737 = vmatpush1.msra.mxu0 0.0
    %738 = vmatprep.subr.mxu0 0.0
    %739 = vmatpush1.msra.mxu0 0.0
    %740 = vmatprep.subr.mxu0 0.0
    %741 = vmatpush1.msra.mxu0 0.0
    %742 = vmatprep.subr.mxu0 0.0
    %743 = vmatpush1.msra.mxu0 0.0
    %744 = vmatprep.subr.mxu0 0.0
    %745 = vmatpush1.msra.mxu0 0.0
    %746 = vmatprep.subr.mxu0 0.0
    %747 = vmatpush1.msra.mxu0 0.0
    %748 = vmatprep.subr.mxu0 0.0
    %749 = vmatpush1.msra.mxu0 0.0
    %750 = vmatprep.subr.mxu0 0.0
    %751 = vmatpush1.msra.mxu0 0.0
    %752 = vmatprep.subr.mxu0 0.0
    %753 = vmatpush1.msra.mxu0 0.0
    %754 = vmatprep.subr.mxu0 0.0
    %755 = vmatpush1.msra.mxu0 0.0
    %756 = vmatprep.subr.mxu0 0.0
    %757 = vmatpush1.msra.mxu0 0.0
    %758 = vmatprep.subr.mxu0 0.0
    %759 = vmatpush1.msra.mxu0 0.0
    %760 = vmatprep.subr.mxu0 0.0
    %761 = vmatpush1.msra.mxu0 0.0
    %762 = vmatprep.subr.mxu0 0.0
    %763 = vmatpush1.msra.mxu0 0.0
    %764 = vmatprep.mubr.f32.mxu0 0.0
    %765 = vmatmul.mubr.f32.gmra.mrb[0].mxu0 %v121
    %v766 = vpop.f32.mrb[0].mxu0
    %v767 = vadd.f32 0.0, %v766
    %v768 = vpop.f32.mrb[0].mxu0
    %769 = vmatprep.mubr.f32.mxu0 0.0
    %770 = vmatmul.mubr.f32.gmra.mrb[0].mxu0 %v122
    %v771 = vpop.f32.mrb[0].mxu0
    %v772 = vadd.f32 0.0, %v771
    %v773 = vpop.f32.mrb[0].mxu0
    %774 = vmatprep.mubr.f32.mxu0 0.0
    %775 = vmatmul.mubr.f32.gmra.mrb[0].mxu0 %v123
    %v776 = vpop.f32.mrb[0].mxu0
    %v777 = vadd.f32 0.0, %v776
    %v778 = vpop.f32.mrb[0].mxu0
    %779 = vmatprep.mubr.f32.mxu0 0.0
    %780 = vmatmul.mubr.f32.gmra.mrb[0].mxu0 %v124
    %v781 = vpop.f32.mrb[0].mxu0
    %v782 = vadd.f32 0.0, %v781
    %v783 = vpop.f32.mrb[0].mxu0
    %784 = vmatprep.mubr.f32.mxu0 0.0
    %785 = vmatmul.mubr.f32.gmra.mrb[0].mxu0 %v125
    %v786 = vpop.f32.mrb[0].mxu0
    %v787 = vadd.f32 0.0, %v786
    %v788 = vpop.f32.mrb[0].mxu0
    %789 = vmatprep.mubr.f32.mxu0 0.0
    %790 = vmatmul.mubr.f32.gmra.mrb[0].mxu0 %v126
    %v791 = vpop.f32.mrb[0].mxu0
    %v792 = vadd.f32 0.0, %v791
    %v793 = vpop.f32.mrb[0].mxu0
    %794 = vmatprep.mubr.f32.mxu0 0.0
    %795 = vmatmul.mubr.f32.gmra.mrb[0].mxu0 %v127
    %v796 = vpop.f32.mrb[0].mxu0
    %v797 = vadd.f32 0.0, %v796
    %v798 = vpop.f32.mrb[0].mxu0
    %799 = vmatprep.mubr.f32.mxu0 0.0
    %800 = vmatmul.mubr.f32.gmra.mrb[0].mxu0 %v128
    %v801 = vpop.f32.mrb[0].mxu0
    %v802 = vadd.f32 0.0, %v801
    %v803 = vpop.f32.mrb[0].mxu0
    %804 = vmatprep.mubr.f32.mxu0 0.0
    %805 = vmatmul.mubr.f32.gmra.mrb[0].mxu0 %v129
    %v806 = vpop.f32.mrb[0].mxu0
    %v807 = vadd.f32 0.0, %v806
    %v808 = vpop.f32.mrb[0].mxu0
    %809 = vmatprep.mubr.f32.mxu0 0.0
    %810 = vmatmul.mubr.f32.gmra.mrb[0].mxu0 %v130
    %v811 = vpop.f32.mrb[0].mxu0
    %v812 = vadd.f32 0.0, %v811
    %v813 = vpop.f32.mrb[0].mxu0
    %814 = vmatprep.mubr.f32.mxu0 0.0
    %815 = vmatmul.mubr.f32.gmra.mrb[0].mxu0 %v131
    %v816 = vpop.f32.mrb[0].mxu0
    %v817 = vadd.f32 0.0, %v816
    %v818 = vpop.f32.mrb[0].mxu0
    %819 = vmatprep.mubr.f32.mxu0 0.0
    %820 = vmatmul.mubr.f32.gmra.mrb[0].mxu0 %v132
    %v821 = vpop.f32.mrb[0].mxu0
    %v822 = vadd.f32 0.0, %v821
    %v823 = vpop.f32.mrb[0].mxu0
    %824 = vmatprep.mubr.f32.mxu0 0.0
    %825 = vmatmul.mubr.f32.gmra.mrb[0].mxu0 %v133
    %v826 = vpop.f32.mrb[0].mxu0
    %v827 = vadd.f32 0.0, %v826
    %v828 = vpop.f32.mrb[0].mxu0
    %829 = vmatprep.mubr.f32.mxu0 0.0
    %830 = vmatmul.mubr.f32.gmra.mrb[0].mxu0 %v134
    %v831 = vpop.f32.mrb[0].mxu0
    %v832 = vadd.f32 0.0, %v831
    %v833 = vpop.f32.mrb[0].mxu0
    %834 = vmatprep.mubr.f32.mxu0 0.0
    %835 = vmatmul.mubr.f32.gmra.mrb[0].mxu0 %v135
    %v836 = vpop.f32.mrb[0].mxu0
    %v837 = vadd.f32 0.0, %v836
    %v838 = vpop.f32.mrb[0].mxu0
    %839 = vmatprep.mubr.f32.mxu0 0.0
    %840 = vmatmul.mubr.f32.gmra.mrb[0].mxu0 %v136
    %v841 = vpop.f32.mrb[0].mxu0
    %v842 = vadd.f32 0.0, %v841
    %v843 = vpop.f32.mrb[0].mxu0
    %844 = vdwg.mxu0
    %s845 = scalar_lea.vmem [#allocation9], 128
    %v846 = vld [vmem:[%s845] sm:$0xff]
    %v847 = vld [vmem:[%s845 + $0x8] sm:$0xff]
    %v848 = vld [vmem:[%s845 + $0x10] sm:$0xff]
    %v849 = vld [vmem:[%s845 + $0x18] sm:$0xff]
    %v850 = vld [vmem:[%s845 + $0x20] sm:$0xff]
    %v851 = vld [vmem:[%s845 + $0x28] sm:$0xff]
    %v852 = vld [vmem:[%s845 + $0x30] sm:$0xff]
    %v853 = vld [vmem:[%s845 + $0x38] sm:$0xff]
    %v854 = vld [vmem:[%s845 + $0x40] sm:$0xff]
    %v855 = vld [vmem:[%s845 + $0x48] sm:$0xff]
    %v856 = vld [vmem:[%s845 + $0x50] sm:$0xff]
    %v857 = vld [vmem:[%s845 + $0x58] sm:$0xff]
    %v858 = vld [vmem:[%s845 + $0x60] sm:$0xff]
    %v859 = vld [vmem:[%s845 + $0x68] sm:$0xff]
    %v860 = vld [vmem:[%s845 + $0x70] sm:$0xff]
    %v861 = vld [vmem:[%s845 + $0x78] sm:$0xff]
    %s862 = scalar_lea.vmem %s3, 1
    %v863 = vld [vmem:[%s862] sm:$0x1]
    %v865 = vlaneseq
    %v866 = vshrl.u32 %v865, 7
    %v867 = vsub.s32 0, %v866
    %v868 = vrot.slane %v863, %v867
    %870 = vmatprep.subr.mxu0 0.0
    %871 = vmatpush1.msra.mxu0 %v846
    %872 = vmatprep.subr.mxu0 0.0
    %873 = vmatpush1.msra.mxu0 %v847
    %874 = vmatprep.subr.mxu0 0.0
    %875 = vmatpush1.msra.mxu0 %v848
    %876 = vmatprep.subr.mxu0 0.0
    %877 = vmatpush1.msra.mxu0 %v849
    %878 = vmatprep.subr.mxu0 0.0
    %879 = vmatpush1.msra.mxu0 %v850
    %880 = vmatprep.subr.mxu0 0.0
    %881 = vmatpush1.msra.mxu0 %v851
    %882 = vmatprep.subr.mxu0 0.0
    %883 = vmatpush1.msra.mxu0 %v852
    %884 = vmatprep.subr.mxu0 0.0
    %885 = vmatpush1.msra.mxu0 %v853
    %886 = vmatprep.subr.mxu0 0.0
    %887 = vmatpush1.msra.mxu0 %v854
    %888 = vmatprep.subr.mxu0 0.0
    %889 = vmatpush1.msra.mxu0 %v855
    %890 = vmatprep.subr.mxu0 0.0
    %891 = vmatpush1.msra.mxu0 %v856
    %892 = vmatprep.subr.mxu0 0.0
    %893 = vmatpush1.msra.mxu0 %v857
    %894 = vmatprep.subr.mxu0 0.0
    %895 = vmatpush1.msra.mxu0 %v858
    %896 = vmatprep.subr.mxu0 0.0
    %897 = vmatpush1.msra.mxu0 %v859
    %898 = vmatprep.subr.mxu0 0.0
    %899 = vmatpush1.msra.mxu0 %v860
    %900 = vmatprep.subr.mxu0 0.0
    %901 = vmatpush1.msra.mxu0 %v861
    %902 = vmatprep.subr.mxu0 0.0
    %903 = vmatpush1.msra.mxu0 0.0
    %904 = vmatprep.subr.mxu0 0.0
    %905 = vmatpush1.msra.mxu0 0.0
    %906 = vmatprep.subr.mxu0 0.0
    %907 = vmatpush1.msra.mxu0 0.0
    %908 = vmatprep.subr.mxu0 0.0
    %909 = vmatpush1.msra.mxu0 0.0
    %910 = vmatprep.subr.mxu0 0.0
    %911 = vmatpush1.msra.mxu0 0.0
    %912 = vmatprep.subr.mxu0 0.0
    %913 = vmatpush1.msra.mxu0 0.0
    %914 = vmatprep.subr.mxu0 0.0
    %915 = vmatpush1.msra.mxu0 0.0
    %916 = vmatprep.subr.mxu0 0.0
    %917 = vmatpush1.msra.mxu0 0.0
    %918 = vmatprep.subr.mxu0 0.0
    %919 = vmatpush1.msra.mxu0 0.0
    %920 = vmatprep.subr.mxu0 0.0
    %921 = vmatpush1.msra.mxu0 0.0
    %922 = vmatprep.subr.mxu0 0.0
    %923 = vmatpush1.msra.mxu0 0.0
    %924 = vmatprep.subr.mxu0 0.0
    %925 = vmatpush1.msra.mxu0 0.0
    %926 = vmatprep.subr.mxu0 0.0
    %927 = vmatpush1.msra.mxu0 0.0
    %928 = vmatprep.subr.mxu0 0.0
    %929 = vmatpush1.msra.mxu0 0.0
    %930 = vmatprep.subr.mxu0 0.0
    %931 = vmatpush1.msra.mxu0 0.0
    %932 = vmatprep.subr.mxu0 0.0
    %933 = vmatpush1.msra.mxu0 0.0
    %934 = vmatprep.mubr.f32.mxu0 0.0
    %935 = vmatmul.mubr.f32.gmra.mrb[0].mxu0 %v767
    %v936 = vpop.f32.mrb[0].mxu0
    %v937 = vadd.f32 %v868, %v936
    %v938 = vpop.f32.mrb[0].mxu0
    %939 = vmatprep.mubr.f32.mxu0 0.0
    %940 = vmatmul.mubr.f32.gmra.mrb[0].mxu0 %v772
    %v941 = vpop.f32.mrb[0].mxu0
    %v942 = vadd.f32 %v868, %v941
    %v943 = vpop.f32.mrb[0].mxu0
    %944 = vmatprep.mubr.f32.mxu0 0.0
    %945 = vmatmul.mubr.f32.gmra.mrb[0].mxu0 %v777
    %v946 = vpop.f32.mrb[0].mxu0
    %v947 = vadd.f32 %v868, %v946
    %v948 = vpop.f32.mrb[0].mxu0
    %949 = vmatprep.mubr.f32.mxu0 0.0
    %950 = vmatmul.mubr.f32.gmra.mrb[0].mxu0 %v782
    %v951 = vpop.f32.mrb[0].mxu0
    %v952 = vadd.f32 %v868, %v951
    %v953 = vpop.f32.mrb[0].mxu0
    %954 = vmatprep.mubr.f32.mxu0 0.0
    %955 = vmatmul.mubr.f32.gmra.mrb[0].mxu0 %v787
    %v956 = vpop.f32.mrb[0].mxu0
    %v957 = vadd.f32 %v868, %v956
    %v958 = vpop.f32.mrb[0].mxu0
    %959 = vmatprep.mubr.f32.mxu0 0.0
    %960 = vmatmul.mubr.f32.gmra.mrb[0].mxu0 %v792
    %v961 = vpop.f32.mrb[0].mxu0
    %v962 = vadd.f32 %v868, %v961
    %v963 = vpop.f32.mrb[0].mxu0
    %964 = vmatprep.mubr.f32.mxu0 0.0
    %965 = vmatmul.mubr.f32.gmra.mrb[0].mxu0 %v797
    %v966 = vpop.f32.mrb[0].mxu0
    %v967 = vadd.f32 %v868, %v966
    %v968 = vpop.f32.mrb[0].mxu0
    %969 = vmatprep.mubr.f32.mxu0 0.0
    %970 = vmatmul.mubr.f32.gmra.mrb[0].mxu0 %v802
    %v971 = vpop.f32.mrb[0].mxu0
    %v972 = vadd.f32 %v868, %v971
    %v973 = vpop.f32.mrb[0].mxu0
    %974 = vmatprep.mubr.f32.mxu0 0.0
    %975 = vmatmul.mubr.f32.gmra.mrb[0].mxu0 %v807
    %v976 = vpop.f32.mrb[0].mxu0
    %v977 = vadd.f32 %v868, %v976
    %v978 = vpop.f32.mrb[0].mxu0
    %979 = vmatprep.mubr.f32.mxu0 0.0
    %980 = vmatmul.mubr.f32.gmra.mrb[0].mxu0 %v812
    %v981 = vpop.f32.mrb[0].mxu0
    %v982 = vadd.f32 %v868, %v981
    %v983 = vpop.f32.mrb[0].mxu0
    %984 = vmatprep.mubr.f32.mxu0 0.0
    %985 = vmatmul.mubr.f32.gmra.mrb[0].mxu0 %v817
    %v986 = vpop.f32.mrb[0].mxu0
    %v987 = vadd.f32 %v868, %v986
    %v988 = vpop.f32.mrb[0].mxu0
    %989 = vmatprep.mubr.f32.mxu0 0.0
    %990 = vmatmul.mubr.f32.gmra.mrb[0].mxu0 %v822
    %v991 = vpop.f32.mrb[0].mxu0
    %v992 = vadd.f32 %v868, %v991
    %v993 = vpop.f32.mrb[0].mxu0
    %994 = vmatprep.mubr.f32.mxu0 0.0
    %995 = vmatmul.mubr.f32.gmra.mrb[0].mxu0 %v827
    %v996 = vpop.f32.mrb[0].mxu0
    %v997 = vadd.f32 %v868, %v996
    %v998 = vpop.f32.mrb[0].mxu0
    %999 = vmatprep.mubr.f32.mxu0 0.0
    %1000 = vmatmul.mubr.f32.gmra.mrb[0].mxu0 %v832
    %v1001 = vpop.f32.mrb[0].mxu0
    %v1002 = vadd.f32 %v868, %v1001
    %v1003 = vpop.f32.mrb[0].mxu0
    %1004 = vmatprep.mubr.f32.mxu0 0.0
    %1005 = vmatmul.mubr.f32.gmra.mrb[0].mxu0 %v837
    %v1006 = vpop.f32.mrb[0].mxu0
    %v1007 = vadd.f32 %v868, %v1006
    %v1008 = vpop.f32.mrb[0].mxu0
    %1009 = vmatprep.mubr.f32.mxu0 0.0
    %1010 = vmatmul.mubr.f32.gmra.mrb[0].mxu0 %v842
    %v1011 = vpop.f32.mrb[0].mxu0
    %v1012 = vadd.f32 %v868, %v1011
    %v1013 = vpop.f32.mrb[0].mxu0
    %1014 = vdwg.mxu0
    %v1015 = vmax.f32 %v937, 0.0
    %v1016 = vmax.f32 %v942, 0.0
    %v1017 = vmax.f32 %v947, 0.0
    %v1018 = vmax.f32 %v952, 0.0
    %v1019 = vmax.f32 %v957, 0.0
    %v1020 = vmax.f32 %v962, 0.0
    %v1021 = vmax.f32 %v967, 0.0
    %v1022 = vmax.f32 %v972, 0.0
    %v1023 = vmax.f32 %v977, 0.0
    %v1024 = vmax.f32 %v982, 0.0
    %v1025 = vmax.f32 %v987, 0.0
    %v1026 = vmax.f32 %v992, 0.0
    %v1027 = vmax.f32 %v997, 0.0
    %v1028 = vmax.f32 %v1002, 0.0
    %v1029 = vmax.f32 %v1007, 0.0
    %v1030 = vmax.f32 %v1012, 0.0
    %s1031 = scalar_lea.vmem [#allocation10], 128
    %v1032 = vld [vmem:[%s1031] sm:$0xff]
    %v1033 = vld [vmem:[%s1031 + $0x8] sm:$0xff]
    %v1034 = vld [vmem:[%s1031 + $0x10] sm:$0xff]
    %v1035 = vld [vmem:[%s1031 + $0x18] sm:$0xff]
    %v1036 = vld [vmem:[%s1031 + $0x20] sm:$0xff]
    %v1037 = vld [vmem:[%s1031 + $0x28] sm:$0xff]
    %v1038 = vld [vmem:[%s1031 + $0x30] sm:$0xff]
    %v1039 = vld [vmem:[%s1031 + $0x38] sm:$0xff]
    %v1040 = vld [vmem:[%s1031 + $0x40] sm:$0xff]
    %v1041 = vld [vmem:[%s1031 + $0x48] sm:$0xff]
    %v1042 = vld [vmem:[%s1031 + $0x50] sm:$0xff]
    %v1043 = vld [vmem:[%s1031 + $0x58] sm:$0xff]
    %v1044 = vld [vmem:[%s1031 + $0x60] sm:$0xff]
    %v1045 = vld [vmem:[%s1031 + $0x68] sm:$0xff]
    %v1046 = vld [vmem:[%s1031 + $0x70] sm:$0xff]
    %v1047 = vld [vmem:[%s1031 + $0x78] sm:$0xff]
    %s1048 = scalar_lea.vmem %s5, 1
    %v1049 = vld [vmem:[%s1048] sm:$0x1]
    %v1051 = vlaneseq
    %v1052 = vshrl.u32 %v1051, 7
    %v1053 = vsub.s32 0, %v1052
    %v1054 = vrot.slane %v1049, %v1053
    %1056 = vmatprep.subr.mxu0 0.0
    %1057 = vmatpush1.msra.mxu0 %v1032
    %1058 = vmatprep.subr.mxu0 0.0
    %1059 = vmatpush1.msra.mxu0 %v1033
    %1060 = vmatprep.subr.mxu0 0.0
    %1061 = vmatpush1.msra.mxu0 %v1034
    %1062 = vmatprep.subr.mxu0 0.0
    %1063 = vmatpush1.msra.mxu0 %v1035
    %1064 = vmatprep.subr.mxu0 0.0
    %1065 = vmatpush1.msra.mxu0 %v1036
    %1066 = vmatprep.subr.mxu0 0.0
    %1067 = vmatpush1.msra.mxu0 %v1037
    %1068 = vmatprep.subr.mxu0 0.0
    %1069 = vmatpush1.msra.mxu0 %v1038
    %1070 = vmatprep.subr.mxu0 0.0
    %1071 = vmatpush1.msra.mxu0 %v1039
    %1072 = vmatprep.subr.mxu0 0.0
    %1073 = vmatpush1.msra.mxu0 %v1040
    %1074 = vmatprep.subr.mxu0 0.0
    %1075 = vmatpush1.msra.mxu0 %v1041
    %1076 = vmatprep.subr.mxu0 0.0
    %1077 = vmatpush1.msra.mxu0 %v1042
    %1078 = vmatprep.subr.mxu0 0.0
    %1079 = vmatpush1.msra.mxu0 %v1043
    %1080 = vmatprep.subr.mxu0 0.0
    %1081 = vmatpush1.msra.mxu0 %v1044
    %1082 = vmatprep.subr.mxu0 0.0
    %1083 = vmatpush1.msra.mxu0 %v1045
    %1084 = vmatprep.subr.mxu0 0.0
    %1085 = vmatpush1.msra.mxu0 %v1046
    %1086 = vmatprep.subr.mxu0 0.0
    %1087 = vmatpush1.msra.mxu0 %v1047
    %1088 = vmatprep.subr.mxu0 0.0
    %1089 = vmatpush1.msra.mxu0 0.0
    %1090 = vmatprep.subr.mxu0 0.0
    %1091 = vmatpush1.msra.mxu0 0.0
    %1092 = vmatprep.subr.mxu0 0.0
    %1093 = vmatpush1.msra.mxu0 0.0
    %1094 = vmatprep.subr.mxu0 0.0
    %1095 = vmatpush1.msra.mxu0 0.0
    %1096 = vmatprep.subr.mxu0 0.0
    %1097 = vmatpush1.msra.mxu0 0.0
    %1098 = vmatprep.subr.mxu0 0.0
    %1099 = vmatpush1.msra.mxu0 0.0
    %1100 = vmatprep.subr.mxu0 0.0
    %1101 = vmatpush1.msra.mxu0 0.0
    %1102 = vmatprep.subr.mxu0 0.0
    %1103 = vmatpush1.msra.mxu0 0.0
    %1104 = vmatprep.subr.mxu0 0.0
    %1105 = vmatpush1.msra.mxu0 0.0
    %1106 = vmatprep.subr.mxu0 0.0
    %1107 = vmatpush1.msra.mxu0 0.0
    %1108 = vmatprep.subr.mxu0 0.0
    %1109 = vmatpush1.msra.mxu0 0.0
    %1110 = vmatprep.subr.mxu0 0.0
    %1111 = vmatpush1.msra.mxu0 0.0
    %1112 = vmatprep.subr.mxu0 0.0
    %1113 = vmatpush1.msra.mxu0 0.0
    %1114 = vmatprep.subr.mxu0 0.0
    %1115 = vmatpush1.msra.mxu0 0.0
    %1116 = vmatprep.subr.mxu0 0.0
    %1117 = vmatpush1.msra.mxu0 0.0
    %1118 = vmatprep.subr.mxu0 0.0
    %1119 = vmatpush1.msra.mxu0 0.0
    %1120 = vmatprep.mubr.f32.mxu0 0.0
    %1121 = vmatmul.mubr.f32.gmra.mrb[0].mxu0 %v1015
    %v1122 = vpop.f32.mrb[0].mxu0
    %v1123 = vadd.f32 %v1054, %v1122
    %v1124 = vpop.f32.mrb[0].mxu0
    %1125 = vmatprep.mubr.f32.mxu0 0.0
    %1126 = vmatmul.mubr.f32.gmra.mrb[0].mxu0 %v1016
    %v1127 = vpop.f32.mrb[0].mxu0
    %v1128 = vadd.f32 %v1054, %v1127
    %v1129 = vpop.f32.mrb[0].mxu0
    %1130 = vmatprep.mubr.f32.mxu0 0.0
    %1131 = vmatmul.mubr.f32.gmra.mrb[0].mxu0 %v1017
    %v1132 = vpop.f32.mrb[0].mxu0
    %v1133 = vadd.f32 %v1054, %v1132
    %v1134 = vpop.f32.mrb[0].mxu0
    %1135 = vmatprep.mubr.f32.mxu0 0.0
    %1136 = vmatmul.mubr.f32.gmra.mrb[0].mxu0 %v1018
    %v1137 = vpop.f32.mrb[0].mxu0
    %v1138 = vadd.f32 %v1054, %v1137
    %v1139 = vpop.f32.mrb[0].mxu0
    %1140 = vmatprep.mubr.f32.mxu0 0.0
    %1141 = vmatmul.mubr.f32.gmra.mrb[0].mxu0 %v1019
    %v1142 = vpop.f32.mrb[0].mxu0
    %v1143 = vadd.f32 %v1054, %v1142
    %v1144 = vpop.f32.mrb[0].mxu0
    %1145 = vmatprep.mubr.f32.mxu0 0.0
    %1146 = vmatmul.mubr.f32.gmra.mrb[0].mxu0 %v1020
    %v1147 = vpop.f32.mrb[0].mxu0
    %v1148 = vadd.f32 %v1054, %v1147
    %v1149 = vpop.f32.mrb[0].mxu0
    %1150 = vmatprep.mubr.f32.mxu0 0.0
    %1151 = vmatmul.mubr.f32.gmra.mrb[0].mxu0 %v1021
    %v1152 = vpop.f32.mrb[0].mxu0
    %v1153 = vadd.f32 %v1054, %v1152
    %v1154 = vpop.f32.mrb[0].mxu0
    %1155 = vmatprep.mubr.f32.mxu0 0.0
    %1156 = vmatmul.mubr.f32.gmra.mrb[0].mxu0 %v1022
    %v1157 = vpop.f32.mrb[0].mxu0
    %v1158 = vadd.f32 %v1054, %v1157
    %v1159 = vpop.f32.mrb[0].mxu0
    %1160 = vmatprep.mubr.f32.mxu0 0.0
    %1161 = vmatmul.mubr.f32.gmra.mrb[0].mxu0 %v1023
    %v1162 = vpop.f32.mrb[0].mxu0
    %v1163 = vadd.f32 %v1054, %v1162
    %v1164 = vpop.f32.mrb[0].mxu0
    %1165 = vmatprep.mubr.f32.mxu0 0.0
    %1166 = vmatmul.mubr.f32.gmra.mrb[0].mxu0 %v1024
    %v1167 = vpop.f32.mrb[0].mxu0
    %v1168 = vadd.f32 %v1054, %v1167
    %v1169 = vpop.f32.mrb[0].mxu0
    %1170 = vmatprep.mubr.f32.mxu0 0.0
    %1171 = vmatmul.mubr.f32.gmra.mrb[0].mxu0 %v1025
    %v1172 = vpop.f32.mrb[0].mxu0
    %v1173 = vadd.f32 %v1054, %v1172
    %v1174 = vpop.f32.mrb[0].mxu0
    %1175 = vmatprep.mubr.f32.mxu0 0.0
    %1176 = vmatmul.mubr.f32.gmra.mrb[0].mxu0 %v1026
    %v1177 = vpop.f32.mrb[0].mxu0
    %v1178 = vadd.f32 %v1054, %v1177
    %v1179 = vpop.f32.mrb[0].mxu0
    %1180 = vmatprep.mubr.f32.mxu0 0.0
    %1181 = vmatmul.mubr.f32.gmra.mrb[0].mxu0 %v1027
    %v1182 = vpop.f32.mrb[0].mxu0
    %v1183 = vadd.f32 %v1054, %v1182
    %v1184 = vpop.f32.mrb[0].mxu0
    %1185 = vmatprep.mubr.f32.mxu0 0.0
    %1186 = vmatmul.mubr.f32.gmra.mrb[0].mxu0 %v1028
    %v1187 = vpop.f32.mrb[0].mxu0
    %v1188 = vadd.f32 %v1054, %v1187
    %v1189 = vpop.f32.mrb[0].mxu0
    %1190 = vmatprep.mubr.f32.mxu0 0.0
    %1191 = vmatmul.mubr.f32.gmra.mrb[0].mxu0 %v1029
    %v1192 = vpop.f32.mrb[0].mxu0
    %v1193 = vadd.f32 %v1054, %v1192
    %v1194 = vpop.f32.mrb[0].mxu0
    %1195 = vmatprep.mubr.f32.mxu0 0.0
    %1196 = vmatmul.mubr.f32.gmra.mrb[0].mxu0 %v1030
    %v1197 = vpop.f32.mrb[0].mxu0
    %v1198 = vadd.f32 %v1054, %v1197
    %v1199 = vpop.f32.mrb[0].mxu0
    %1200 = vdwg.mxu0
    %vm1201 = vcmp.ge.f32.partialorder %v1123, 0.0
    %vm1202 = vcmp.ge.f32.partialorder %v1128, 0.0
    %vm1203 = vcmp.ge.f32.partialorder %v1133, 0.0
    %vm1204 = vcmp.ge.f32.partialorder %v1138, 0.0
    %vm1205 = vcmp.ge.f32.partialorder %v1143, 0.0
    %vm1206 = vcmp.ge.f32.partialorder %v1148, 0.0
    %vm1207 = vcmp.ge.f32.partialorder %v1153, 0.0
    %vm1208 = vcmp.ge.f32.partialorder %v1158, 0.0
    %vm1209 = vcmp.ge.f32.partialorder %v1163, 0.0
    %vm1210 = vcmp.ge.f32.partialorder %v1168, 0.0
    %vm1211 = vcmp.ge.f32.partialorder %v1173, 0.0
    %vm1212 = vcmp.ge.f32.partialorder %v1178, 0.0
    %vm1213 = vcmp.ge.f32.partialorder %v1183, 0.0
    %vm1214 = vcmp.ge.f32.partialorder %v1188, 0.0
    %vm1215 = vcmp.ge.f32.partialorder %v1193, 0.0
    %vm1216 = vcmp.ge.f32.partialorder %v1198, 0.0
    %v1217 = vmul.f32 %v667, %v1123
    %v1218 = vmul.f32 %v667, %v1128
    %v1219 = vmul.f32 %v667, %v1133
    %v1220 = vmul.f32 %v667, %v1138
    %v1221 = vmul.f32 %v667, %v1143
    %v1222 = vmul.f32 %v667, %v1148
    %v1223 = vmul.f32 %v667, %v1153
    %v1224 = vmul.f32 %v667, %v1158
    %v1225 = vmul.f32 %v667, %v1163
    %v1226 = vmul.f32 %v667, %v1168
    %v1227 = vmul.f32 %v667, %v1173
    %v1228 = vmul.f32 %v667, %v1178
    %v1229 = vmul.f32 %v667, %v1183
    %v1230 = vmul.f32 %v667, %v1188
    %v1231 = vmul.f32 %v667, %v1193
    %v1232 = vmul.f32 %v667, %v1198
    %v1233 = vsel %vm1201, %v1123, %v1217
    %v1234 = vsel %vm1202, %v1128, %v1218
    %v1235 = vsel %vm1203, %v1133, %v1219
    %v1236 = vsel %vm1204, %v1138, %v1220
    %v1237 = vsel %vm1205, %v1143, %v1221
    %v1238 = vsel %vm1206, %v1148, %v1222
    %v1239 = vsel %vm1207, %v1153, %v1223
    %v1240 = vsel %vm1208, %v1158, %v1224
    %v1241 = vsel %vm1209, %v1163, %v1225
    %v1242 = vsel %vm1210, %v1168, %v1226
    %v1243 = vsel %vm1211, %v1173, %v1227
    %v1244 = vsel %vm1212, %v1178, %v1228
    %v1245 = vsel %vm1213, %v1183, %v1229
    %v1246 = vsel %vm1214, %v1188, %v1230
    %v1247 = vsel %vm1215, %v1193, %v1231
    %v1248 = vsel %vm1216, %v1198, %v1232
    %v1249 = vlaneseq
    %v1250 = vshrl.u32 %v1249, 7
    %v1251 = vadd.s32 %v1250, 8
    %v1252 = vadd.s32 %v1250, 16
    %v1253 = vadd.s32 %v1250, 24
    %v1254 = vadd.s32 %v1250, 32
    %v1255 = vadd.s32 %v1250, 40
    %v1256 = vadd.s32 %v1250, 48
    %v1257 = vadd.s32 %v1250, 56
    %v1258 = vadd.s32 %v1250, 64
    %v1259 = vadd.s32 %v1250, 72
    %v1260 = vadd.s32 %v1250, 80
    %v1261 = vadd.s32 %v1250, 88
    %v1262 = vadd.s32 %v1250, 96
    %v1263 = vadd.s32 %v1250, 104
    %v1264 = vadd.s32 %v1250, 112
    %v1265 = vadd.s32 %v1250, 120
    %vm1266 = vcmp.lt.s32.totalorder %v1250, 32
    %vm1267 = vcmp.lt.s32.totalorder %v1251, 32
    %vm1268 = vcmp.lt.s32.totalorder %v1252, 32
    %vm1269 = vcmp.lt.s32.totalorder %v1253, 32
    %vm1270 = vcmp.lt.s32.totalorder %v1254, 32
    %vm1271 = vcmp.lt.s32.totalorder %v1255, 32
    %vm1272 = vcmp.lt.s32.totalorder %v1256, 32
    %vm1273 = vcmp.lt.s32.totalorder %v1257, 32
    %vm1274 = vcmp.lt.s32.totalorder %v1258, 32
    %vm1275 = vcmp.lt.s32.totalorder %v1259, 32
    %vm1276 = vcmp.lt.s32.totalorder %v1260, 32
    %vm1277 = vcmp.lt.s32.totalorder %v1261, 32
    %vm1278 = vcmp.lt.s32.totalorder %v1262, 32
    %vm1279 = vcmp.lt.s32.totalorder %v1263, 32
    %vm1280 = vcmp.lt.s32.totalorder %v1264, 32
    %vm1281 = vcmp.lt.s32.totalorder %v1265, 32
    %v1282 = vsel %vm1266, 1, 0
    %v1283 = vsel %vm1267, 1, 0
    %v1284 = vsel %vm1268, 1, 0
    %v1285 = vsel %vm1269, 1, 0
    %v1286 = vsel %vm1270, 1, 0
    %v1287 = vsel %vm1271, 1, 0
    %v1288 = vsel %vm1272, 1, 0
    %v1289 = vsel %vm1273, 1, 0
    %v1290 = vsel %vm1274, 1, 0
    %v1291 = vsel %vm1275, 1, 0
    %v1292 = vsel %vm1276, 1, 0
    %v1293 = vsel %vm1277, 1, 0
    %v1294 = vsel %vm1278, 1, 0
    %v1295 = vsel %vm1279, 1, 0
    %v1296 = vsel %vm1280, 1, 0
    %v1297 = vsel %vm1281, 1, 0
    %v1298 = vcvt.s32.f32 %v1282
    %v1299 = vcvt.s32.f32 %v1283
    %v1300 = vcvt.s32.f32 %v1284
    %v1301 = vcvt.s32.f32 %v1285
    %v1302 = vcvt.s32.f32 %v1286
    %v1303 = vcvt.s32.f32 %v1287
    %v1304 = vcvt.s32.f32 %v1288
    %v1305 = vcvt.s32.f32 %v1289
    %v1306 = vcvt.s32.f32 %v1290
    %v1307 = vcvt.s32.f32 %v1291
    %v1308 = vcvt.s32.f32 %v1292
    %v1309 = vcvt.s32.f32 %v1293
    %v1310 = vcvt.s32.f32 %v1294
    %v1311 = vcvt.s32.f32 %v1295
    %v1312 = vcvt.s32.f32 %v1296
    %v1313 = vcvt.s32.f32 %v1297
    %v1314 = vld [vmem:[%s6] sm:$0x1]
    %v1315 = vld [vmem:[%s7] sm:$0x1]
    %v1316 = vmul.f32 %v1233, %v1298
    %v1317 = vmul.f32 %v1234, %v1299
    %v1318 = vmul.f32 %v1235, %v1300
    %v1319 = vmul.f32 %v1236, %v1301
    %v1320 = vmul.f32 %v1237, %v1302
    %v1321 = vmul.f32 %v1238, %v1303
    %v1322 = vmul.f32 %v1239, %v1304
    %v1323 = vmul.f32 %v1240, %v1305
    %v1324 = vmul.f32 %v1241, %v1306
    %v1325 = vmul.f32 %v1242, %v1307
    %v1326 = vmul.f32 %v1243, %v1308
    %v1327 = vmul.f32 %v1244, %v1309
    %v1328 = vmul.f32 %v1245, %v1310
    %v1329 = vmul.f32 %v1246, %v1311
    %v1330 = vmul.f32 %v1247, %v1312
    %v1331 = vmul.f32 %v1248, %v1313
    %v1332 = vadd.f32 %v1316, %v1317
    %v1333 = vadd.f32 %v1332, %v1318
    %v1334 = vadd.f32 %v1333, %v1319
    %v1335 = vadd.f32 %v1334, %v1320
    %v1336 = vadd.f32 %v1335, %v1321
    %v1337 = vadd.f32 %v1336, %v1322
    %v1338 = vadd.f32 %v1337, %v1323
    %v1339 = vadd.f32 %v1338, %v1324
    %v1340 = vadd.f32 %v1339, %v1325
    %v1341 = vadd.f32 %v1340, %v1326
    %v1342 = vadd.f32 %v1341, %v1327
    %v1343 = vadd.f32 %v1342, %v1328
    %v1344 = vadd.f32 %v1343, %v1329
    %v1345 = vadd.f32 %v1344, %v1330
    %v1346 = vadd.f32 %v1345, %v1331
    %v1347 = vrot.slane %v1346, 4
    %v1348 = vadd.f32 %v1346, %v1347
    %v1349 = vrot.slane %v1348, 2
    %v1350 = vadd.f32 %v1348, %v1349
    %v1351 = vrot.slane %v1350, 1
    %v1352 = vadd.f32 %v1350, %v1351
    %v1353 = vmul.f32 %v1352, 0.03125
    %v1354 = vmul.f32 %v1316, %v1316
    %v1355 = vmul.f32 %v1317, %v1317
    %v1356 = vmul.f32 %v1318, %v1318
    %v1357 = vmul.f32 %v1319, %v1319
    %v1358 = vmul.f32 %v1320, %v1320
    %v1359 = vmul.f32 %v1321, %v1321
    %v1360 = vmul.f32 %v1322, %v1322
    %v1361 = vmul.f32 %v1323, %v1323
    %v1362 = vmul.f32 %v1324, %v1324
    %v1363 = vmul.f32 %v1325, %v1325
    %v1364 = vmul.f32 %v1326, %v1326
    %v1365 = vmul.f32 %v1327, %v1327
    %v1366 = vmul.f32 %v1328, %v1328
    %v1367 = vmul.f32 %v1329, %v1329
    %v1368 = vmul.f32 %v1330, %v1330
    %v1369 = vmul.f32 %v1331, %v1331
    %v1370 = vadd.f32 %v1354, %v1355
    %v1371 = vadd.f32 %v1370, %v1356
    %v1372 = vadd.f32 %v1371, %v1357
    %v1373 = vadd.f32 %v1372, %v1358
    %v1374 = vadd.f32 %v1373, %v1359
    %v1375 = vadd.f32 %v1374, %v1360
    %v1376 = vadd.f32 %v1375, %v1361
    %v1377 = vadd.f32 %v1376, %v1362
    %v1378 = vadd.f32 %v1377, %v1363
    %v1379 = vadd.f32 %v1378, %v1364
    %v1380 = vadd.f32 %v1379, %v1365
    %v1381 = vadd.f32 %v1380, %v1366
    %v1382 = vadd.f32 %v1381, %v1367
    %v1383 = vadd.f32 %v1382, %v1368
    %v1384 = vadd.f32 %v1383, %v1369
    %v1385 = vrot.slane %v1384, 4
    %v1386 = vadd.f32 %v1384, %v1385
    %v1387 = vrot.slane %v1386, 2
    %v1388 = vadd.f32 %v1386, %v1387
    %v1389 = vrot.slane %v1388, 1
    %v1390 = vadd.f32 %v1388, %v1389
    %v1391 = vmul.f32 %v1390, 0.03125
    %v1392 = vmul.f32 %v1353, %v1353
    %v1393 = vsub.f32 %v1391, %v1392
    %v1394 = vmax.f32 %v1393, 0.0
    %v1395 = vsub.f32 %v1233, %v1353
    %v1396 = vsub.f32 %v1234, %v1353
    %v1397 = vsub.f32 %v1235, %v1353
    %v1398 = vsub.f32 %v1236, %v1353
    %v1399 = vsub.f32 %v1237, %v1353
    %v1400 = vsub.f32 %v1238, %v1353
    %v1401 = vsub.f32 %v1239, %v1353
    %v1402 = vsub.f32 %v1240, %v1353
    %v1403 = vsub.f32 %v1241, %v1353
    %v1404 = vsub.f32 %v1242, %v1353
    %v1405 = vsub.f32 %v1243, %v1353
    %v1406 = vsub.f32 %v1244, %v1353
    %v1407 = vsub.f32 %v1245, %v1353
    %v1408 = vsub.f32 %v1246, %v1353
    %v1409 = vsub.f32 %v1247, %v1353
    %v1410 = vsub.f32 %v1248, %v1353
    %v1411 = vadd.f32 %v1394, 1e-05
    %v1412 = vrsqrt.pop %v1411
    %v1413 = vmul.f32 %v1395, %v1412
    %v1414 = vmul.f32 %v1396, %v1412
    %v1415 = vmul.f32 %v1397, %v1412
    %v1416 = vmul.f32 %v1398, %v1412
    %v1417 = vmul.f32 %v1399, %v1412
    %v1418 = vmul.f32 %v1400, %v1412
    %v1419 = vmul.f32 %v1401, %v1412
    %v1420 = vmul.f32 %v1402, %v1412
    %v1421 = vmul.f32 %v1403, %v1412
    %v1422 = vmul.f32 %v1404, %v1412
    %v1423 = vmul.f32 %v1405, %v1412
    %v1424 = vmul.f32 %v1406, %v1412
    %v1425 = vmul.f32 %v1407, %v1412
    %v1426 = vmul.f32 %v1408, %v1412
    %v1427 = vmul.f32 %v1409, %v1412
    %v1428 = vmul.f32 %v1410, %v1412
    %v1430 = vlaneseq
    %v1431 = vshrl.u32 %v1430, 7
    %v1432 = vsub.s32 0, %v1431
    %v1433 = vrot.slane %v1314, %v1432
    %v1435 = vmul.f32 %v1413, %v1433
    %v1436 = vmul.f32 %v1414, %v1433
    %v1437 = vmul.f32 %v1415, %v1433
    %v1438 = vmul.f32 %v1416, %v1433
    %v1439 = vmul.f32 %v1417, %v1433
    %v1440 = vmul.f32 %v1418, %v1433
    %v1441 = vmul.f32 %v1419, %v1433
    %v1442 = vmul.f32 %v1420, %v1433
    %v1443 = vmul.f32 %v1421, %v1433
    %v1444 = vmul.f32 %v1422, %v1433
    %v1445 = vmul.f32 %v1423, %v1433
    %v1446 = vmul.f32 %v1424, %v1433
    %v1447 = vmul.f32 %v1425, %v1433
    %v1448 = vmul.f32 %v1426, %v1433
    %v1449 = vmul.f32 %v1427, %v1433
    %v1450 = vmul.f32 %v1428, %v1433
    %v1452 = vlaneseq
    %v1453 = vshrl.u32 %v1452, 7
    %v1454 = vsub.s32 0, %v1453
    %v1455 = vrot.slane %v1315, %v1454
    %v1457 = vadd.f32 %v1435, %v1455
    %v1458 = vadd.f32 %v1436, %v1455
    %v1459 = vadd.f32 %v1437, %v1455
    %v1460 = vadd.f32 %v1438, %v1455
    %v1461 = vadd.f32 %v1439, %v1455
    %v1462 = vadd.f32 %v1440, %v1455
    %v1463 = vadd.f32 %v1441, %v1455
    %v1464 = vadd.f32 %v1442, %v1455
    %v1465 = vadd.f32 %v1443, %v1455
    %v1466 = vadd.f32 %v1444, %v1455
    %v1467 = vadd.f32 %v1445, %v1455
    %v1468 = vadd.f32 %v1446, %v1455
    %v1469 = vadd.f32 %v1447, %v1455
    %v1470 = vadd.f32 %v1448, %v1455
    %v1471 = vadd.f32 %v1449, %v1455
    %v1472 = vadd.f32 %v1450, %v1455
    %1473 = vst [vmem:[#allocation13] sm:$0xff] %v1457
    %1474 = vst [vmem:[#allocation13 + $0x8] sm:$0xff] %v1458
    %1475 = vst [vmem:[#allocation13 + $0x10] sm:$0xff] %v1459
    %1476 = vst [vmem:[#allocation13 + $0x18] sm:$0xff] %v1460
    %1477 = vst [vmem:[#allocation13 + $0x20] sm:$0xff] %v1461
    %1478 = vst [vmem:[#allocation13 + $0x28] sm:$0xff] %v1462
    %1479 = vst [vmem:[#allocation13 + $0x30] sm:$0xff] %v1463
    %1480 = vst [vmem:[#allocation13 + $0x38] sm:$0xff] %v1464
    %1481 = vst [vmem:[#allocation13 + $0x40] sm:$0xff] %v1465
    %1482 = vst [vmem:[#allocation13 + $0x48] sm:$0xff] %v1466
    %1483 = vst [vmem:[#allocation13 + $0x50] sm:$0xff] %v1467
    %1484 = vst [vmem:[#allocation13 + $0x58] sm:$0xff] %v1468
    %1485 = vst [vmem:[#allocation13 + $0x60] sm:$0xff] %v1469
    %1486 = vst [vmem:[#allocation13 + $0x68] sm:$0xff] %v1470
    %1487 = vst [vmem:[#allocation13 + $0x70] sm:$0xff] %v1471
    %1488 = vst [vmem:[#allocation13 + $0x78] sm:$0xff] %v1472
    %v1489 = vld [vmem:[#allocation12] sm:$0xff]
    %v1490 = vld [vmem:[#allocation12 + $0x8] sm:$0xff]
    %v1491 = vld [vmem:[#allocation12 + $0x10] sm:$0xff]
    %v1492 = vld [vmem:[#allocation12 + $0x18] sm:$0xff]
    %v1493 = vld [vmem:[#allocation12 + $0x20] sm:$0xff]
    %v1494 = vld [vmem:[#allocation12 + $0x28] sm:$0xff]
    %v1495 = vld [vmem:[#allocation12 + $0x30] sm:$0xff]
    %v1496 = vld [vmem:[#allocation12 + $0x38] sm:$0xff]
    %v1497 = vld [vmem:[#allocation12 + $0x40] sm:$0xff]
    %v1498 = vld [vmem:[#allocation12 + $0x48] sm:$0xff]
    %v1499 = vld [vmem:[#allocation12 + $0x50] sm:$0xff]
    %v1500 = vld [vmem:[#allocation12 + $0x58] sm:$0xff]
    %v1501 = vld [vmem:[#allocation12 + $0x60] sm:$0xff]
    %v1502 = vld [vmem:[#allocation12 + $0x68] sm:$0xff]
    %v1503 = vld [vmem:[#allocation12 + $0x70] sm:$0xff]
    %v1504 = vld [vmem:[#allocation12 + $0x78] sm:$0xff]
    %v1505 = vld [vmem:[%s9] sm:$0x1]
    %v1507 = vlaneseq
    %v1508 = vshrl.u32 %v1507, 7
    %v1509 = vsub.s32 0, %v1508
    %v1510 = vrot.slane %v1505, %v1509
    %1512 = vmatprep.subr.mxu0 0.0
    %1513 = vmatpush1.msra.mxu0 %v1489
    %1514 = vmatprep.subr.mxu0 0.0
    %1515 = vmatpush1.msra.mxu0 %v1490
    %1516 = vmatprep.subr.mxu0 0.0
    %1517 = vmatpush1.msra.mxu0 %v1491
    %1518 = vmatprep.subr.mxu0 0.0
    %1519 = vmatpush1.msra.mxu0 %v1492
    %1520 = vmatprep.subr.mxu0 0.0
    %1521 = vmatpush1.msra.mxu0 %v1493
    %1522 = vmatprep.subr.mxu0 0.0
    %1523 = vmatpush1.msra.mxu0 %v1494
    %1524 = vmatprep.subr.mxu0 0.0
    %1525 = vmatpush1.msra.mxu0 %v1495
    %1526 = vmatprep.subr.mxu0 0.0
    %1527 = vmatpush1.msra.mxu0 %v1496
    %1528 = vmatprep.subr.mxu0 0.0
    %1529 = vmatpush1.msra.mxu0 %v1497
    %1530 = vmatprep.subr.mxu0 0.0
    %1531 = vmatpush1.msra.mxu0 %v1498
    %1532 = vmatprep.subr.mxu0 0.0
    %1533 = vmatpush1.msra.mxu0 %v1499
    %1534 = vmatprep.subr.mxu0 0.0
    %1535 = vmatpush1.msra.mxu0 %v1500
    %1536 = vmatprep.subr.mxu0 0.0
    %1537 = vmatpush1.msra.mxu0 %v1501
    %1538 = vmatprep.subr.mxu0 0.0
    %1539 = vmatpush1.msra.mxu0 %v1502
    %1540 = vmatprep.subr.mxu0 0.0
    %1541 = vmatpush1.msra.mxu0 %v1503
    %1542 = vmatprep.subr.mxu0 0.0
    %1543 = vmatpush1.msra.mxu0 %v1504
    %1544 = vmatprep.subr.mxu0 0.0
    %1545 = vmatpush1.msra.mxu0 0.0
    %1546 = vmatprep.subr.mxu0 0.0
    %1547 = vmatpush1.msra.mxu0 0.0
    %1548 = vmatprep.subr.mxu0 0.0
    %1549 = vmatpush1.msra.mxu0 0.0
    %1550 = vmatprep.subr.mxu0 0.0
    %1551 = vmatpush1.msra.mxu0 0.0
    %1552 = vmatprep.subr.mxu0 0.0
    %1553 = vmatpush1.msra.mxu0 0.0
    %1554 = vmatprep.subr.mxu0 0.0
    %1555 = vmatpush1.msra.mxu0 0.0
    %1556 = vmatprep.subr.mxu0 0.0
    %1557 = vmatpush1.msra.mxu0 0.0
    %1558 = vmatprep.subr.mxu0 0.0
    %1559 = vmatpush1.msra.mxu0 0.0
    %1560 = vmatprep.subr.mxu0 0.0
    %1561 = vmatpush1.msra.mxu0 0.0
    %1562 = vmatprep.subr.mxu0 0.0
    %1563 = vmatpush1.msra.mxu0 0.0
    %1564 = vmatprep.subr.mxu0 0.0
    %1565 = vmatpush1.msra.mxu0 0.0
    %1566 = vmatprep.subr.mxu0 0.0
    %1567 = vmatpush1.msra.mxu0 0.0
    %1568 = vmatprep.subr.mxu0 0.0
    %1569 = vmatpush1.msra.mxu0 0.0
    %1570 = vmatprep.subr.mxu0 0.0
    %1571 = vmatpush1.msra.mxu0 0.0
    %1572 = vmatprep.subr.mxu0 0.0
    %1573 = vmatpush1.msra.mxu0 0.0
    %1574 = vmatprep.subr.mxu0 0.0
    %1575 = vmatpush1.msra.mxu0 0.0
    %1576 = vmatprep.mubr.f32.mxu0 0.0
    %1577 = vmatmul.mubr.f32.gmra.mrb[0].mxu0 %v1457
    %v1578 = vpop.f32.mrb[0].mxu0
    %v1579 = vadd.f32 %v1510, %v1578
    %v1580 = vpop.f32.mrb[0].mxu0
    %1581 = vmatprep.mubr.f32.mxu0 0.0
    %1582 = vmatmul.mubr.f32.gmra.mrb[0].mxu0 %v1458
    %v1583 = vpop.f32.mrb[0].mxu0
    %v1584 = vadd.f32 %v1510, %v1583
    %v1585 = vpop.f32.mrb[0].mxu0
    %1586 = vmatprep.mubr.f32.mxu0 0.0
    %1587 = vmatmul.mubr.f32.gmra.mrb[0].mxu0 %v1459
    %v1588 = vpop.f32.mrb[0].mxu0
    %v1589 = vadd.f32 %v1510, %v1588
    %v1590 = vpop.f32.mrb[0].mxu0
    %1591 = vmatprep.mubr.f32.mxu0 0.0
    %1592 = vmatmul.mubr.f32.gmra.mrb[0].mxu0 %v1460
    %v1593 = vpop.f32.mrb[0].mxu0
    %v1594 = vadd.f32 %v1510, %v1593
    %v1595 = vpop.f32.mrb[0].mxu0
    %1596 = vmatprep.mubr.f32.mxu0 0.0
    %1597 = vmatmul.mubr.f32.gmra.mrb[0].mxu0 %v1461
    %v1598 = vpop.f32.mrb[0].mxu0
    %v1599 = vadd.f32 %v1510, %v1598
    %v1600 = vpop.f32.mrb[0].mxu0
    %1601 = vmatprep.mubr.f32.mxu0 0.0
    %1602 = vmatmul.mubr.f32.gmra.mrb[0].mxu0 %v1462
    %v1603 = vpop.f32.mrb[0].mxu0
    %v1604 = vadd.f32 %v1510, %v1603
    %v1605 = vpop.f32.mrb[0].mxu0
    %1606 = vmatprep.mubr.f32.mxu0 0.0
    %1607 = vmatmul.mubr.f32.gmra.mrb[0].mxu0 %v1463
    %v1608 = vpop.f32.mrb[0].mxu0
    %v1609 = vadd.f32 %v1510, %v1608
    %v1610 = vpop.f32.mrb[0].mxu0
    %1611 = vmatprep.mubr.f32.mxu0 0.0
    %1612 = vmatmul.mubr.f32.gmra.mrb[0].mxu0 %v1464
    %v1613 = vpop.f32.mrb[0].mxu0
    %v1614 = vadd.f32 %v1510, %v1613
    %v1615 = vpop.f32.mrb[0].mxu0
    %1616 = vmatprep.mubr.f32.mxu0 0.0
    %1617 = vmatmul.mubr.f32.gmra.mrb[0].mxu0 %v1465
    %v1618 = vpop.f32.mrb[0].mxu0
    %v1619 = vadd.f32 %v1510, %v1618
    %v1620 = vpop.f32.mrb[0].mxu0
    %1621 = vmatprep.mubr.f32.mxu0 0.0
    %1622 = vmatmul.mubr.f32.gmra.mrb[0].mxu0 %v1466
    %v1623 = vpop.f32.mrb[0].mxu0
    %v1624 = vadd.f32 %v1510, %v1623
    %v1625 = vpop.f32.mrb[0].mxu0
    %1626 = vmatprep.mubr.f32.mxu0 0.0
    %1627 = vmatmul.mubr.f32.gmra.mrb[0].mxu0 %v1467
    %v1628 = vpop.f32.mrb[0].mxu0
    %v1629 = vadd.f32 %v1510, %v1628
    %v1630 = vpop.f32.mrb[0].mxu0
    %1631 = vmatprep.mubr.f32.mxu0 0.0
    %1632 = vmatmul.mubr.f32.gmra.mrb[0].mxu0 %v1468
    %v1633 = vpop.f32.mrb[0].mxu0
    %v1634 = vadd.f32 %v1510, %v1633
    %v1635 = vpop.f32.mrb[0].mxu0
    %1636 = vmatprep.mubr.f32.mxu0 0.0
    %1637 = vmatmul.mubr.f32.gmra.mrb[0].mxu0 %v1469
    %v1638 = vpop.f32.mrb[0].mxu0
    %v1639 = vadd.f32 %v1510, %v1638
    %v1640 = vpop.f32.mrb[0].mxu0
    %1641 = vmatprep.mubr.f32.mxu0 0.0
    %1642 = vmatmul.mubr.f32.gmra.mrb[0].mxu0 %v1470
    %v1643 = vpop.f32.mrb[0].mxu0
    %v1644 = vadd.f32 %v1510, %v1643
    %v1645 = vpop.f32.mrb[0].mxu0
    %1646 = vmatprep.mubr.f32.mxu0 0.0
    %1647 = vmatmul.mubr.f32.gmra.mrb[0].mxu0 %v1471
    %v1648 = vpop.f32.mrb[0].mxu0
    %v1649 = vadd.f32 %v1510, %v1648
    %v1650 = vpop.f32.mrb[0].mxu0
    %1651 = vmatprep.mubr.f32.mxu0 0.0
    %1652 = vmatmul.mubr.f32.gmra.mrb[0].mxu0 %v1472
    %v1653 = vpop.f32.mrb[0].mxu0
    %v1654 = vadd.f32 %v1510, %v1653
    %v1655 = vpop.f32.mrb[0].mxu0
    %1656 = vdwg.mxu0
    %v1657 = vld [vmem:[%s10] sm:$0x1]
    %v1658 = vld [vmem:[%s11] sm:$0x1]
    %v1659 = vmul.f32 %v1579, %v1298
    %v1660 = vmul.f32 %v1584, %v1299
    %v1661 = vmul.f32 %v1589, %v1300
    %v1662 = vmul.f32 %v1594, %v1301
    %v1663 = vmul.f32 %v1599, %v1302
    %v1664 = vmul.f32 %v1604, %v1303
    %v1665 = vmul.f32 %v1609, %v1304
    %v1666 = vmul.f32 %v1614, %v1305
    %v1667 = vmul.f32 %v1619, %v1306
    %v1668 = vmul.f32 %v1624, %v1307
    %v1669 = vmul.f32 %v1629, %v1308
    %v1670 = vmul.f32 %v1634, %v1309
    %v1671 = vmul.f32 %v1639, %v1310
    %v1672 = vmul.f32 %v1644, %v1311
    %v1673 = vmul.f32 %v1649, %v1312
    %v1674 = vmul.f32 %v1654, %v1313
    %v1675 = vadd.f32 %v1659, %v1660
    %v1676 = vadd.f32 %v1675, %v1661
    %v1677 = vadd.f32 %v1676, %v1662
    %v1678 = vadd.f32 %v1677, %v1663
    %v1679 = vadd.f32 %v1678, %v1664
    %v1680 = vadd.f32 %v1679, %v1665
    %v1681 = vadd.f32 %v1680, %v1666
    %v1682 = vadd.f32 %v1681, %v1667
    %v1683 = vadd.f32 %v1682, %v1668
    %v1684 = vadd.f32 %v1683, %v1669
    %v1685 = vadd.f32 %v1684, %v1670
    %v1686 = vadd.f32 %v1685, %v1671
    %v1687 = vadd.f32 %v1686, %v1672
    %v1688 = vadd.f32 %v1687, %v1673
    %v1689 = vadd.f32 %v1688, %v1674
    %v1690 = vrot.slane %v1689, 4
    %v1691 = vadd.f32 %v1689, %v1690
    %v1692 = vrot.slane %v1691, 2
    %v1693 = vadd.f32 %v1691, %v1692
    %v1694 = vrot.slane %v1693, 1
    %v1695 = vadd.f32 %v1693, %v1694
    %v1696 = vmul.f32 %v1695, 0.03125
    %v1697 = vmul.f32 %v1659, %v1659
    %v1698 = vmul.f32 %v1660, %v1660
    %v1699 = vmul.f32 %v1661, %v1661
    %v1700 = vmul.f32 %v1662, %v1662
    %v1701 = vmul.f32 %v1663, %v1663
    %v1702 = vmul.f32 %v1664, %v1664
    %v1703 = vmul.f32 %v1665, %v1665
    %v1704 = vmul.f32 %v1666, %v1666
    %v1705 = vmul.f32 %v1667, %v1667
    %v1706 = vmul.f32 %v1668, %v1668
    %v1707 = vmul.f32 %v1669, %v1669
    %v1708 = vmul.f32 %v1670, %v1670
    %v1709 = vmul.f32 %v1671, %v1671
    %v1710 = vmul.f32 %v1672, %v1672
    %v1711 = vmul.f32 %v1673, %v1673
    %v1712 = vmul.f32 %v1674, %v1674
    %v1713 = vadd.f32 %v1697, %v1698
    %v1714 = vadd.f32 %v1713, %v1699
    %v1715 = vadd.f32 %v1714, %v1700
    %v1716 = vadd.f32 %v1715, %v1701
    %v1717 = vadd.f32 %v1716, %v1702
    %v1718 = vadd.f32 %v1717, %v1703
    %v1719 = vadd.f32 %v1718, %v1704
    %v1720 = vadd.f32 %v1719, %v1705
    %v1721 = vadd.f32 %v1720, %v1706
    %v1722 = vadd.f32 %v1721, %v1707
    %v1723 = vadd.f32 %v1722, %v1708
    %v1724 = vadd.f32 %v1723, %v1709
    %v1725 = vadd.f32 %v1724, %v1710
    %v1726 = vadd.f32 %v1725, %v1711
    %v1727 = vadd.f32 %v1726, %v1712
    %v1728 = vrot.slane %v1727, 4
    %v1729 = vadd.f32 %v1727, %v1728
    %v1730 = vrot.slane %v1729, 2
    %v1731 = vadd.f32 %v1729, %v1730
    %v1732 = vrot.slane %v1731, 1
    %v1733 = vadd.f32 %v1731, %v1732
    %v1734 = vmul.f32 %v1733, 0.03125
    %v1735 = vmul.f32 %v1696, %v1696
    %v1736 = vsub.f32 %v1734, %v1735
    %v1737 = vmax.f32 %v1736, 0.0
    %v1738 = vsub.f32 %v1579, %v1696
    %v1739 = vsub.f32 %v1584, %v1696
    %v1740 = vsub.f32 %v1589, %v1696
    %v1741 = vsub.f32 %v1594, %v1696
    %v1742 = vsub.f32 %v1599, %v1696
    %v1743 = vsub.f32 %v1604, %v1696
    %v1744 = vsub.f32 %v1609, %v1696
    %v1745 = vsub.f32 %v1614, %v1696
    %v1746 = vsub.f32 %v1619, %v1696
    %v1747 = vsub.f32 %v1624, %v1696
    %v1748 = vsub.f32 %v1629, %v1696
    %v1749 = vsub.f32 %v1634, %v1696
    %v1750 = vsub.f32 %v1639, %v1696
    %v1751 = vsub.f32 %v1644, %v1696
    %v1752 = vsub.f32 %v1649, %v1696
    %v1753 = vsub.f32 %v1654, %v1696
    %v1754 = vadd.f32 %v1737, 1e-05
    %v1755 = vrsqrt.pop %v1754
    %v1756 = vmul.f32 %v1738, %v1755
    %v1757 = vmul.f32 %v1739, %v1755
    %v1758 = vmul.f32 %v1740, %v1755
    %v1759 = vmul.f32 %v1741, %v1755
    %v1760 = vmul.f32 %v1742, %v1755
    %v1761 = vmul.f32 %v1743, %v1755
    %v1762 = vmul.f32 %v1744, %v1755
    %v1763 = vmul.f32 %v1745, %v1755
    %v1764 = vmul.f32 %v1746, %v1755
    %v1765 = vmul.f32 %v1747, %v1755
    %v1766 = vmul.f32 %v1748, %v1755
    %v1767 = vmul.f32 %v1749, %v1755
    %v1768 = vmul.f32 %v1750, %v1755
    %v1769 = vmul.f32 %v1751, %v1755
    %v1770 = vmul.f32 %v1752, %v1755
    %v1771 = vmul.f32 %v1753, %v1755
    %v1773 = vlaneseq
    %v1774 = vshrl.u32 %v1773, 7
    %v1775 = vsub.s32 0, %v1774
    %v1776 = vrot.slane %v1657, %v1775
    %v1778 = vmul.f32 %v1756, %v1776
    %v1779 = vmul.f32 %v1757, %v1776
    %v1780 = vmul.f32 %v1758, %v1776
    %v1781 = vmul.f32 %v1759, %v1776
    %v1782 = vmul.f32 %v1760, %v1776
    %v1783 = vmul.f32 %v1761, %v1776
    %v1784 = vmul.f32 %v1762, %v1776
    %v1785 = vmul.f32 %v1763, %v1776
    %v1786 = vmul.f32 %v1764, %v1776
    %v1787 = vmul.f32 %v1765, %v1776
    %v1788 = vmul.f32 %v1766, %v1776
    %v1789 = vmul.f32 %v1767, %v1776
    %v1790 = vmul.f32 %v1768, %v1776
    %v1791 = vmul.f32 %v1769, %v1776
    %v1792 = vmul.f32 %v1770, %v1776
    %v1793 = vmul.f32 %v1771, %v1776
    %v1795 = vlaneseq
    %v1796 = vshrl.u32 %v1795, 7
    %v1797 = vsub.s32 0, %v1796
    %v1798 = vrot.slane %v1658, %v1797
    %v1800 = vadd.f32 %v1778, %v1798
    %v1801 = vadd.f32 %v1779, %v1798
    %v1802 = vadd.f32 %v1780, %v1798
    %v1803 = vadd.f32 %v1781, %v1798
    %v1804 = vadd.f32 %v1782, %v1798
    %v1805 = vadd.f32 %v1783, %v1798
    %v1806 = vadd.f32 %v1784, %v1798
    %v1807 = vadd.f32 %v1785, %v1798
    %v1808 = vadd.f32 %v1786, %v1798
    %v1809 = vadd.f32 %v1787, %v1798
    %v1810 = vadd.f32 %v1788, %v1798
    %v1811 = vadd.f32 %v1789, %v1798
    %v1812 = vadd.f32 %v1790, %v1798
    %v1813 = vadd.f32 %v1791, %v1798
    %v1814 = vadd.f32 %v1792, %v1798
    %v1815 = vadd.f32 %v1793, %v1798
    %s1816 = sld [smem:[#allocation3]]
    %vm1817 = vcmp.ge.f32.partialorder %v1800, 0.0
    %vm1818 = vcmp.ge.f32.partialorder %v1801, 0.0
    %vm1819 = vcmp.ge.f32.partialorder %v1802, 0.0
    %vm1820 = vcmp.ge.f32.partialorder %v1803, 0.0
    %vm1821 = vcmp.ge.f32.partialorder %v1804, 0.0
    %vm1822 = vcmp.ge.f32.partialorder %v1805, 0.0
    %vm1823 = vcmp.ge.f32.partialorder %v1806, 0.0
    %vm1824 = vcmp.ge.f32.partialorder %v1807, 0.0
    %vm1825 = vcmp.ge.f32.partialorder %v1808, 0.0
    %vm1826 = vcmp.ge.f32.partialorder %v1809, 0.0
    %vm1827 = vcmp.ge.f32.partialorder %v1810, 0.0
    %vm1828 = vcmp.ge.f32.partialorder %v1811, 0.0
    %vm1829 = vcmp.ge.f32.partialorder %v1812, 0.0
    %vm1830 = vcmp.ge.f32.partialorder %v1813, 0.0
    %vm1831 = vcmp.ge.f32.partialorder %v1814, 0.0
    %vm1832 = vcmp.ge.f32.partialorder %v1815, 0.0
    %v1833 = vstv %s1816
    %v1834 = vmul.f32 %v1833, %v1800
    %v1835 = vmul.f32 %v1833, %v1801
    %v1836 = vmul.f32 %v1833, %v1802
    %v1837 = vmul.f32 %v1833, %v1803
    %v1838 = vmul.f32 %v1833, %v1804
    %v1839 = vmul.f32 %v1833, %v1805
    %v1840 = vmul.f32 %v1833, %v1806
    %v1841 = vmul.f32 %v1833, %v1807
    %v1842 = vmul.f32 %v1833, %v1808
    %v1843 = vmul.f32 %v1833, %v1809
    %v1844 = vmul.f32 %v1833, %v1810
    %v1845 = vmul.f32 %v1833, %v1811
    %v1846 = vmul.f32 %v1833, %v1812
    %v1847 = vmul.f32 %v1833, %v1813
    %v1848 = vmul.f32 %v1833, %v1814
    %v1849 = vmul.f32 %v1833, %v1815
    %v1850 = vsel %vm1817, %v1800, %v1834
    %v1851 = vsel %vm1818, %v1801, %v1835
    %v1852 = vsel %vm1819, %v1802, %v1836
    %v1853 = vsel %vm1820, %v1803, %v1837
    %v1854 = vsel %vm1821, %v1804, %v1838
    %v1855 = vsel %vm1822, %v1805, %v1839
    %v1856 = vsel %vm1823, %v1806, %v1840
    %v1857 = vsel %vm1824, %v1807, %v1841
    %v1858 = vsel %vm1825, %v1808, %v1842
    %v1859 = vsel %vm1826, %v1809, %v1843
    %v1860 = vsel %vm1827, %v1810, %v1844
    %v1861 = vsel %vm1828, %v1811, %v1845
    %v1862 = vsel %vm1829, %v1812, %v1846
    %v1863 = vsel %vm1830, %v1813, %v1847
    %v1864 = vsel %vm1831, %v1814, %v1848
    %v1865 = vsel %vm1832, %v1815, %v1849
    %1866 = vst [vmem:[#allocation14] sm:$0xff] %v1850
    %1867 = vst [vmem:[#allocation14 + $0x8] sm:$0xff] %v1851
    %1868 = vst [vmem:[#allocation14 + $0x10] sm:$0xff] %v1852
    %1869 = vst [vmem:[#allocation14 + $0x18] sm:$0xff] %v1853
    %1870 = vst [vmem:[#allocation14 + $0x20] sm:$0xff] %v1854
    %1871 = vst [vmem:[#allocation14 + $0x28] sm:$0xff] %v1855
    %1872 = vst [vmem:[#allocation14 + $0x30] sm:$0xff] %v1856
    %1873 = vst [vmem:[#allocation14 + $0x38] sm:$0xff] %v1857
    %1874 = vst [vmem:[#allocation14 + $0x40] sm:$0xff] %v1858
    %1875 = vst [vmem:[#allocation14 + $0x48] sm:$0xff] %v1859
    %1876 = vst [vmem:[#allocation14 + $0x50] sm:$0xff] %v1860
    %1877 = vst [vmem:[#allocation14 + $0x58] sm:$0xff] %v1861
    %1878 = vst [vmem:[#allocation14 + $0x60] sm:$0xff] %v1862
    %1879 = vst [vmem:[#allocation14 + $0x68] sm:$0xff] %v1863
    %1880 = vst [vmem:[#allocation14 + $0x70] sm:$0xff] %v1864
    %1881 = vst [vmem:[#allocation14 + $0x78] sm:$0xff] %v1865
    // Predicated region
    $region78: #{tpu_custom_call.1} parent=1 // pred_check
      _
    $region79: #{tpu_custom_call.1} parent=1 // pred_check_branch
      %1883 = sbr.rel (0) target = $region81
    $region80: #{tpu_custom_call.1} parent=1 // pred_region
      %s1885 = ssub.s32 2048, 2048
      %1886 = vsyncadd [#allocation6], %s1885
      %s1887 = sshll.u32 [#allocation13], 4
      %s1888 = int_to_ptr.vmem [resolvable:$true] %s1887
      %1893 = dma.vmem_to_hbm [thread:$0]  %s1888, 2048, %s14, [#allocation6], 128, 128, 8
    $region81: #{tpu_custom_call.1} parent=1 // pred_fallthru
      _
    // Predicated region
    $region82: #{tpu_custom_call.1} parent=1 // pred_check
      _
    $region83: #{tpu_custom_call.1} parent=1 // pred_check_branch
      %1895 = sbr.rel (0) target = $region85
    $region84: #{tpu_custom_call.1} parent=1 // pred_region
      %s1897 = ssub.s32 2048, 2048
      %1898 = vsyncadd [#allocation15], %s1897
      %s1899 = sshll.u32 [#allocation14], 4
      %s1900 = int_to_ptr.vmem [resolvable:$true] %s1899
      %1905 = dma.vmem_to_hbm [thread:$0]  %s1900, 2048, %s15, [#allocation15], 128, 128, 8
    $region85: #{tpu_custom_call.1} parent=1 // pred_fallthru
      _
    // Predicated region
    $region86: #{tpu_custom_call.1} parent=1 // pred_check
      _
    $region87: #{tpu_custom_call.1} parent=1 // pred_check_branch
      %1907 = sbr.rel (0) target = $region89
    $region88: #{tpu_custom_call.1} parent=1 // pred_region
      %1908 = dma.done [#allocation6], 2048
    $region89: #{tpu_custom_call.1} parent=1 // pred_fallthru
      _
    // Predicated region
    $region90: #{tpu_custom_call.1} parent=1 // pred_check
      _
    $region91: #{tpu_custom_call.1} parent=1 // pred_check_branch
      %1910 = sbr.rel (0) target = $region93
    $region92: #{tpu_custom_call.1} parent=1 // pred_region
      %1911 = dma.done [#allocation15], 2048
    $region93: #{tpu_custom_call.1} parent=1 // pred_fallthru
      _
    %1912 = vsyncpa [#allocation5], 1
    %1913 = vsyncpa [#allocation8], 1
    %1914 = vsyncpa [#allocation11], 1
    %1915 = vsyncpa [#allocation6], 1
    %1916 = vsyncpa [#allocation15], 1

</llo_original>
